<compile_context>
chip_gen: v7x
topology: tpu7x:2x2x1
jax: 0.10.0
libtpu: 0.0.40
codegen_flags: <defaults>
</compile_context>

<pallas_src>
import functools

import jax
import jax.numpy as jnp
from jax.experimental import pallas as pl
from jax.experimental.pallas import tpu as pltpu


def _local_attention_kernel(x_ref, wq_ref, wv_ref, bv_ref, wt_ref, sh_ref,
                            o_ref, *, bf16_exp):
    """One grid step == one batch element (channel-last layout).

    x_ref : (1, N, C)  f32   input points
    wq_ref: (C, Cqp)   bf16  shared q/k weight (transposed, lane-padded to 128)
    wv_ref: (C, C)     bf16  v_conv weight (transposed)
    bv_ref: (1, C)     f32   v_conv bias
    wt_ref: (C, C)     bf16  trans_conv weight (transposed, eval-BN scale folded)
    sh_ref: (1, C)     f32   folded trans_conv bias + BN shift
    o_ref : (1, N, C)  f32   output
    """
    x = x_ref[0]                                                  # (N, C) f32
    x16 = x.astype(jnp.bfloat16)

    # --- shared q/k projection (bf16 operands, f32 MXU accumulation) -------
    q = jnp.dot(x16, wq_ref[...],
                preferred_element_type=jnp.float32).astype(jnp.bfloat16)

    # --- v projection -------------------------------------------------------
    v16 = (jnp.dot(x16, wv_ref[...], preferred_element_type=jnp.float32)
           + bv_ref[...]).astype(jnp.bfloat16)                    # (N, C)

    # --- energy = q @ k^T ; q == k (shared weight, no bias) -> symmetric ---
    energy = jax.lax.dot_general(
        q, q, dimension_numbers=(((1,), (1,)), ((), ())),
        preferred_element_type=jnp.float32)                       # (N, N) f32

    # --- column softmax of the symmetric energy == transposed row softmax.
    #     Makes x_r = attn_t @ v a canonical MXU matmul (no (N,N) XLU
    #     transpose, no extra (N,N) f32 temporary).
    c = jnp.max(energy, axis=0, keepdims=True)                    # (1, N)
    e = energy - c
    if bf16_exp:                      # bf16 EUP (v6e / v7x): ~2x exp throughput
        p = jnp.exp(e.astype(jnp.bfloat16))
        s = jnp.sum(p.astype(jnp.float32), axis=0, keepdims=True)  # f32 sums
    else:                             # v5e has no bf16 EUP: keep f32 exp
        p = jnp.exp(e)
        s = jnp.sum(p, axis=0, keepdims=True)

    # The module's extra renormalization divides by (1e-9 + sum(attn)); since
    # sum(attn) == 1 up to rounding this is a factor (1 + 1e-9) and is fused
    # into one scale: a single (1, N) EUP reciprocal + one broadcast multiply
    # instead of a second full (N, N) reduction and two (N, N) divides.
    inv = pl.reciprocal(s * (1.0 + 1e-9), approx=True)            # (1, N) f32
    attn_t = (p * inv.astype(p.dtype)).astype(jnp.bfloat16)       # (N, N) bf16

    # --- x_r (channel-last): x_r[n, c] = sum_m attn[m, n] * v[m, c] --------
    x_r = jnp.dot(attn_t, v16, preferred_element_type=jnp.float32)  # (N, C)

    # --- trans_conv + folded BN shift + ReLU, then residual add ------------
    d = (x - x_r).astype(jnp.bfloat16)
    t = jnp.dot(d, wt_ref[...], preferred_element_type=jnp.float32)
    t = jnp.maximum(t + sh_ref[...], 0.0)                         # (N, C)

    o_ref[0] = x + t


def _vmem_limit_bytes():
    """Per-core VMEM budget: physical capacity minus ~15% pipeline headroom,
    capped at 112 MiB on the 128-MiB parts (v5e/v6e); ~54 MiB on v7x."""
    try:
        cap = int(getattr(pltpu.get_tpu_info(), "vmem_capacity_bytes"))
    except Exception:
        cap = 64 * 1024 * 1024          # conservative fallback (v7x physical)
    return min(int(cap * 0.85), 112 * 1024 * 1024)


def _bf16_exp_supported():
    """bf16 EUP exists on v6e / v7x; keep f32 exp on v5e and older."""
    try:
        kind = jax.devices()[0].device_kind.lower()
    except Exception:
        return False
    return ("v6" in kind) or ("v7" in kind) or ("7x" in kind)


def local_attention_forward(x_bnc, wq_t, wv_t, bv_row, wt_t, sh_row):
    """x_bnc: (B, N, C) f32 channel-last input  ->  (B, N, C) f32 output."""
    B, N, C = x_bnc.shape
    assert C % 128 == 0, "channels must be lane-dense (multiple of 128)"
    assert N % 16 == 0, "number of points must be a multiple of 16 (bf16 pack)"

    full = lambda a: pl.BlockSpec(a.shape, lambda b: (0, 0))

    grid_spec = pltpu.PrefetchScalarGridSpec(
        num_scalar_prefetch=0,
        grid=(B,),
        in_specs=[
            pl.BlockSpec((1, N, C), lambda b: (b, 0, 0)),         # x tile
            full(wq_t), full(wv_t), full(bv_row), full(wt_t), full(sh_row),
        ],
        out_specs=pl.BlockSpec((1, N, C), lambda b: (b, 0, 0)),
    )

    kernel = functools.partial(_local_attention_kernel,
                               bf16_exp=_bf16_exp_supported())

    return pl.pallas_call(
        kernel,
        out_shape=jax.ShapeDtypeStruct((B, N, C), jnp.float32),
        grid_spec=grid_spec,
        compiler_params=pltpu.CompilerParams(
            # Batch axis is embarrassingly parallel (megacore / dual-TC v7x).
            # NOTE: with B == 1 on v7x one TensorCore idles; a query-parallel
            # split (two half-N output tiles per batch) would feed both cores.
            dimension_semantics=("parallel",),
            vmem_limit_bytes=_vmem_limit_bytes(),
        ),
    )(x_bnc, wq_t, wv_t, bv_row, wt_t, sh_row)


def _make_params(key, channels, r):
    """Deterministic synthetic parameters matching the nn.Module shapes."""
    C, Cq = channels, channels // r
    ks = jax.random.split(key, 10)
    eps = 1e-5

    def u(k, shape, fan_in):
        bound = 1.0 / jnp.sqrt(fan_in)
        return jax.random.uniform(k, shape, jnp.float32, -bound, bound)

    wq = u(ks[0], (Cq, C), C)                     # shared q/k weight, bias=False
    wv = u(ks[1], (C, C), C)
    bv = u(ks[2], (C,), C)
    wt = u(ks[3], (C, C), C)
    bt = u(ks[4], (C,), C)

    gamma = 1.0 + 0.1 * jax.random.normal(ks[5], (C,), jnp.float32)
    beta = 0.1 * jax.random.normal(ks[6], (C,), jnp.float32)
    mean = 0.1 * jax.random.normal(ks[7], (C,), jnp.float32)
    var = 1.0 + 0.1 * jax.random.uniform(ks[8], (C,), jnp.float32)

    raw = dict(wq=wq, wv=wv, bv=bv, wt=wt, bt=bt,
               gamma=gamma, beta=beta, mean=mean, var=var, eps=eps)

    # --- fold / lay out parameters for the kernel --------------------------
    # q/k weight: transpose + zero-pad the C/r output dim to a lane-dense 128,
    # stored in bf16 (f32 accumulation in-kernel).
    Cqp = ((Cq + 127) // 128) * 128
    wq_t = (jnp.zeros((C, Cqp), jnp.float32)
            .at[:, :Cq].set(wq.T).astype(jnp.bfloat16))

    wv_t = wv.T.astype(jnp.bfloat16)
    bv_row = bv.reshape(1, C)

    # Inference-mode BN folded into trans_conv: scale into weight columns,
    # bias+shift into one additive row.
    s = gamma / jnp.sqrt(var + eps)
    wt_t = (wt.T * s[None, :]).astype(jnp.bfloat16)
    sh_row = ((bt - mean) * s + beta).reshape(1, C)

    folded = dict(wq_t=wq_t, wv_t=wv_t, bv_row=bv_row, wt_t=wt_t, sh_row=sh_row)
    return raw, folded


def _reference(x_bcl, p):
    """Plain-JAX f32 reference mirroring the PyTorch forward (eval-mode BN)."""
    eps = p["eps"]
    xq = jnp.einsum("bcn,qc->bnq", x_bcl, p["wq"])                 # (B, N, Cq)
    xk = jnp.einsum("bcn,qc->bqn", x_bcl, p["wq"])                 # (B, Cq, N)
    xv = jnp.einsum("bcn,oc->bon", x_bcl, p["wv"]) + p["bv"][None, :, None]
    energy = jnp.einsum("bnq,bqm->bnm", xq, xk)                    # (B, N, N)
    attn = jax.nn.softmax(energy, axis=-1)
    attn = attn / (1e-9 + jnp.sum(attn, axis=-1, keepdims=True))
    x_r = jnp.einsum("bcm,bmn->bcn", xv, attn)                     # (B, C, N)
    d = x_bcl - x_r
    t = jnp.einsum("bcn,oc->bon", d, p["wt"]) + p["bt"][None, :, None]
    s = p["gamma"] / jnp.sqrt(p["var"] + eps)
    t = (t - p["mean"][None, :, None]) * s[None, :, None] + p["beta"][None, :, None]
    t = jnp.maximum(t, 0.0)
    return x_bcl + t                                               # (B, C, N)


if __name__ == "__main__":
    key = jax.random.PRNGKey(0)
    k_x, k_p = jax.random.split(key)

    B, C, N, r = 2, 128, 256, 4            # small shapes for the example run
    # PyTorch-convention NCL input: (B, C, N)
    x_bcl = jax.random.normal(k_x, (B, C, N), jnp.float32)

    raw, folded = _make_params(k_p, C, r)

    # Glue: NCL -> channel-last (B, N, C) layout for the kernel.
    x_bnc = jnp.transpose(x_bcl, (0, 2, 1))

    fwd = jax.jit(local_attention_forward)
    out_bnc = fwd(x_bnc,
                  folded["wq_t"], folded["wv_t"], folded["bv_row"],
                  folded["wt_t"], folded["sh_row"])
    out_bnc = jax.block_until_ready(out_bnc)

    out_bcl = jnp.transpose(out_bnc, (0, 2, 1))                    # back to NCL
    ref = _reference(x_bcl, raw)

    assert out_bcl.shape == (B, C, N)
    err = float(jnp.max(jnp.abs(out_bcl - ref)))
    # bf16 operands on all matmuls (f32 accumulation), bf16 softmax weights,
    # approx reciprocal -> small mixed-precision error vs the all-f32 reference.
    assert err < 5e-2, f"mismatch vs reference: max abs err = {err}"

    print("KERNEL_OK")
</pallas_src>

<mosaic_0001>
module attributes {stable_mosaic.version = 11 : i64} {
  func.func @_local_attention_kernel(%arg0: i32, %arg1: memref<1x256x128xf32, #tpu.memory_space<vmem>>, %arg2: memref<128x128xbf16, #tpu.memory_space<vmem>>, %arg3: memref<128x128xbf16, #tpu.memory_space<vmem>>, %arg4: memref<1x128xf32, #tpu.memory_space<vmem>>, %arg5: memref<128x128xbf16, #tpu.memory_space<vmem>>, %arg6: memref<1x128xf32, #tpu.memory_space<vmem>>, %arg7: memref<1x256x128xf32, #tpu.memory_space<vmem>>) attributes {dimension_semantics = [#tpu.dimension_semantics<parallel>], iteration_bounds = array<i64: 2>, scalar_prefetch = 0 : i64, scratch_operands = 0 : i64, tpu.core_type = #tpu.core_type<tc>, window_params = [{transform_indices = @transform_0, window_bounds = array<i64: 1, 256, 128>}, {pipeline_mode = #tpu.pipeline_mode<synchronous>, transform_indices = @transform_1, window_bounds = array<i64: 128, 128>}, {pipeline_mode = #tpu.pipeline_mode<synchronous>, transform_indices = @transform_2, window_bounds = array<i64: 128, 128>}, {pipeline_mode = #tpu.pipeline_mode<synchronous>, transform_indices = @transform_3, window_bounds = array<i64: 1, 128>}, {pipeline_mode = #tpu.pipeline_mode<synchronous>, transform_indices = @transform_4, window_bounds = array<i64: 128, 128>}, {pipeline_mode = #tpu.pipeline_mode<synchronous>, transform_indices = @transform_5, window_bounds = array<i64: 1, 128>}, {transform_indices = @transform_6, window_bounds = array<i64: 1, 256, 128>}]} {
    %c0 = arith.constant 0 : index
    %c0_0 = arith.constant 0 : index
    %c0_1 = arith.constant 0 : index
    %0 = vector.load %arg1[%c0, %c0_0, %c0_1] : memref<1x256x128xf32, #tpu.memory_space<vmem>>, vector<1x256x128xf32>
    %1 = vector.shape_cast %0 : vector<1x256x128xf32> to vector<256x128xf32>
    %2 = arith.truncf %1 : vector<256x128xf32> to vector<256x128xbf16>
    %c0_2 = arith.constant 0 : index
    %c0_3 = arith.constant 0 : index
    %3 = vector.load %arg2[%c0_2, %c0_3] : memref<128x128xbf16, #tpu.memory_space<vmem>>, vector<128x128xbf16>
    %cst = arith.constant dense<0.000000e+00> : vector<256x128xf32>
    %4 = tpu.matmul %2, %3, %cst {dimension_numbers = #tpu.dot_dimension_numbers<[1], [0], [0], [1], [0, 0, 1, 1], [], []>} : vector<256x128xbf16>, vector<128x128xbf16>, vector<256x128xf32> -> vector<256x128xf32>
    %5 = arith.truncf %4 : vector<256x128xf32> to vector<256x128xbf16>
    %c0_4 = arith.constant 0 : index
    %c0_5 = arith.constant 0 : index
    %6 = vector.load %arg3[%c0_4, %c0_5] : memref<128x128xbf16, #tpu.memory_space<vmem>>, vector<128x128xbf16>
    %cst_6 = arith.constant dense<0.000000e+00> : vector<256x128xf32>
    %7 = tpu.matmul %2, %6, %cst_6 {dimension_numbers = #tpu.dot_dimension_numbers<[1], [0], [0], [1], [0, 0, 1, 1], [], []>} : vector<256x128xbf16>, vector<128x128xbf16>, vector<256x128xf32> -> vector<256x128xf32>
    %c0_7 = arith.constant 0 : index
    %c0_8 = arith.constant 0 : index
    %8 = vector.load %arg4[%c0_7, %c0_8] : memref<1x128xf32, #tpu.memory_space<vmem>>, vector<1x128xf32>
    %9 = vector.broadcast %8 : vector<1x128xf32> to vector<256x128xf32>
    %10 = arith.addf %7, %9 : vector<256x128xf32>
    %11 = arith.truncf %10 : vector<256x128xf32> to vector<256x128xbf16>
    %cst_9 = arith.constant dense<0.000000e+00> : vector<256x256xf32>
    %12 = tpu.matmul %5, %5, %cst_9 {dimension_numbers = #tpu.dot_dimension_numbers<[1], [1], [0], [0], [0, 0, 1, 0], [], []>} : vector<256x128xbf16>, vector<256x128xbf16>, vector<256x256xf32> -> vector<256x256xf32>
    %cst_10 = arith.constant dense<0xFF800000> : vector<256xf32>
    %13 = vector.multi_reduction <maximumf>, %12, %cst_10 [0] : vector<256x256xf32> to vector<256xf32>
    %14 = vector.shape_cast %13 : vector<256xf32> to vector<1x256xf32>
    %15 = vector.broadcast %14 : vector<1x256xf32> to vector<256x256xf32>
    %16 = arith.subf %12, %15 : vector<256x256xf32>
    %17 = math.exp %16 : vector<256x256xf32>
    %cst_11 = arith.constant dense<0.000000e+00> : vector<256xf32>
    %18 = vector.multi_reduction <add>, %17, %cst_11 [0] : vector<256x256xf32> to vector<256xf32>
    %19 = vector.shape_cast %18 : vector<256xf32> to vector<1x256xf32>
    %cst_12 = arith.constant 1.000000e+00 : f32
    %20 = vector.broadcast %cst_12 : f32 to vector<1x256xf32>
    %21 = arith.mulf %19, %20 : vector<1x256xf32>
    %22 = tpu.reciprocal %21 {approx = true} : vector<1x256xf32> -> vector<1x256xf32>
    %23 = vector.broadcast %22 : vector<1x256xf32> to vector<256x256xf32>
    %24 = arith.mulf %17, %23 : vector<256x256xf32>
    %25 = arith.truncf %24 : vector<256x256xf32> to vector<256x256xbf16>
    %cst_13 = arith.constant dense<0.000000e+00> : vector<256x128xf32>
    %26 = tpu.matmul %25, %11, %cst_13 {dimension_numbers = #tpu.dot_dimension_numbers<[1], [0], [0], [1], [0, 0, 1, 1], [], []>} : vector<256x256xbf16>, vector<256x128xbf16>, vector<256x128xf32> -> vector<256x128xf32>
    %27 = arith.subf %1, %26 : vector<256x128xf32>
    %28 = arith.truncf %27 : vector<256x128xf32> to vector<256x128xbf16>
    %c0_14 = arith.constant 0 : index
    %c0_15 = arith.constant 0 : index
    %29 = vector.load %arg5[%c0_14, %c0_15] : memref<128x128xbf16, #tpu.memory_space<vmem>>, vector<128x128xbf16>
    %cst_16 = arith.constant dense<0.000000e+00> : vector<256x128xf32>
    %30 = tpu.matmul %28, %29, %cst_16 {dimension_numbers = #tpu.dot_dimension_numbers<[1], [0], [0], [1], [0, 0, 1, 1], [], []>} : vector<256x128xbf16>, vector<128x128xbf16>, vector<256x128xf32> -> vector<256x128xf32>
    %c0_17 = arith.constant 0 : index
    %c0_18 = arith.constant 0 : index
    %31 = vector.load %arg6[%c0_17, %c0_18] : memref<1x128xf32, #tpu.memory_space<vmem>>, vector<1x128xf32>
    %32 = vector.broadcast %31 : vector<1x128xf32> to vector<256x128xf32>
    %33 = arith.addf %30, %32 : vector<256x128xf32>
    %cst_19 = arith.constant 0.000000e+00 : f32
    %34 = vector.broadcast %cst_19 : f32 to vector<256x128xf32>
    %35 = arith.maximumf %33, %34 : vector<256x128xf32>
    %36 = arith.addf %1, %35 : vector<256x128xf32>
    %c0_20 = arith.constant 0 : index
    %c0_21 = arith.constant 0 : index
    %c0_22 = arith.constant 0 : index
    %37 = vector.load %arg7[%c0_20, %c0_21, %c0_22] : memref<1x256x128xf32, #tpu.memory_space<vmem>>, vector<1x256x128xf32>
    %38 = vector.shape_cast %37 : vector<1x256x128xf32> to vector<256x128xf32>
    %39 = vector.shape_cast %36 : vector<256x128xf32> to vector<1x256x128xf32>
    tpu.vector_store %arg7[%c0_20, %c0_21, %c0_22], %39 {strides = array<i32>} : memref<1x256x128xf32, #tpu.memory_space<vmem>>, vector<1x256x128xf32>,
    return
  }
  func.func @transform_0(%arg0: i32) -> (i32, i32, i32) {
    %c0_i32 = arith.constant 0 : i32
    %c0_i32_0 = arith.constant 0 : i32
    %c0_i32_1 = arith.constant 0 : i32
    return %arg0, %c0_i32, %c0_i32_0 : i32, i32, i32
  }
  func.func @transform_1(%arg0: i32) -> (i32, i32) {
    %c0_i32 = arith.constant 0 : i32
    %c0_i32_0 = arith.constant 0 : i32
    %c0_i32_1 = arith.constant 0 : i32
    return %c0_i32, %c0_i32_0 : i32, i32
  }
  func.func @transform_2(%arg0: i32) -> (i32, i32) {
    %c0_i32 = arith.constant 0 : i32
    %c0_i32_0 = arith.constant 0 : i32
    %c0_i32_1 = arith.constant 0 : i32
    return %c0_i32, %c0_i32_0 : i32, i32
  }
  func.func @transform_3(%arg0: i32) -> (i32, i32) {
    %c0_i32 = arith.constant 0 : i32
    %c0_i32_0 = arith.constant 0 : i32
    %c0_i32_1 = arith.constant 0 : i32
    return %c0_i32, %c0_i32_0 : i32, i32
  }
  func.func @transform_4(%arg0: i32) -> (i32, i32) {
    %c0_i32 = arith.constant 0 : i32
    %c0_i32_0 = arith.constant 0 : i32
    %c0_i32_1 = arith.constant 0 : i32
    return %c0_i32, %c0_i32_0 : i32, i32
  }
  func.func @transform_5(%arg0: i32) -> (i32, i32) {
    %c0_i32 = arith.constant 0 : i32
    %c0_i32_0 = arith.constant 0 : i32
    %c0_i32_1 = arith.constant 0 : i32
    return %c0_i32, %c0_i32_0 : i32, i32
  }
  func.func @transform_6(%arg0: i32) -> (i32, i32, i32) {
    %c0_i32 = arith.constant 0 : i32
    %c0_i32_0 = arith.constant 0 : i32
    %c0_i32_1 = arith.constant 0 : i32
    return %arg0, %c0_i32, %c0_i32_0 : i32, i32, i32
  }
}

</mosaic_0001>

<llo_original>
// kernel: local_attention_forward.1
$region0: #{local_attention_forward.1}
  #allocation0 [shape = 'u32[]', space=smem, size = 0x4, offset = 0x4, fixed_abs, tag = 'smem constant byte address 0x4 - core index']
  #allocation1 [shape = 'u32[144,128]{1,0:T(1,128)}', space=vmem, size = 0x12000, scoped, tag = 'internal scratch']
  %s0 = inlined_call_operand.hbm [shape: f32[2,256,128], index: 0, kind: input, shape index: {}]
  %s1 = inlined_call_operand.hbm [shape: bf16[128,128], index: 1, kind: input, shape index: {}]
  %s2 = inlined_call_operand.hbm [shape: bf16[128,128], index: 2, kind: input, shape index: {}]
  %s3 = inlined_call_operand.vmem [shape: f32[1,128], index: 3, kind: input, shape index: {}]
  %s4 = inlined_call_operand.hbm [shape: bf16[128,128], index: 4, kind: input, shape index: {}]
  %s5 = inlined_call_operand.vmem [shape: f32[1,128], index: 5, kind: input, shape index: {}]
  %s6 = inlined_call_operand.hbm [shape: f32[2,256,128], index: 6, kind: output, shape index: {}]
  %s7 = sld [smem:[#allocation0]]
  $region73: #{local_attention_forward.1} parent=0
    _
  %s9 = ssub.s32 1, %s7
  %s10 = scalar_select 0, %s9, %s7
  $region1: #{local_attention_forward.1} parent=0
    #allocation2 [shape = 'u8[262144]{0}', space=vmem, size = 0x40000, scoped, tag = 'input window, operand 0']
    #allocation3 [shape = 's32[2]{0}', space=sflag, size = 0x8, scoped, tag = 'scoped memory for local_attention_forward.1']
    #allocation4 [shape = 's32[2]{0}', space=sflag, size = 0x8, scoped, tag = 'scoped memory for local_attention_forward.1']
    #allocation5 [shape = 'u8[32768]{0}', space=vmem, size = 0x8000, scoped, tag = 'input window, operand 1, single buffered']
    #allocation6 [shape = 's32[1]{0}', space=sflag, size = 0x4, scoped, tag = 'scoped memory for local_attention_forward.1']
    #allocation7 [shape = 'u8[32768]{0}', space=vmem, size = 0x8000, scoped, tag = 'input window, operand 2, single buffered']
    #allocation8 [shape = 'u8[32768]{0}', space=vmem, size = 0x8000, scoped, tag = 'input window, operand 4, single buffered']
    #allocation9 [shape = 's32[1]{0}', space=sflag, size = 0x4, scoped, tag = 'scoped memory for local_attention_forward.1']
    #allocation10 [shape = 'u8[262144]{0}', space=vmem, size = 0x40000, scoped, tag = 'output window, operand 0']
    %11 = vsyncpa [#allocation3], 0
    %s12 = scalar_lea.sflag [#allocation3], 1
    %13 = vsyncpa %s12, 0
    %14 = vsyncpa [#allocation6], 0
    %15 = vsyncpa [#allocation9], 0
    %16 = vsyncpa [#allocation4], 0
    %s17 = scalar_lea.sflag [#allocation4], 1
    %18 = vsyncpa %s17, 0
    loop: start=0, step=1, limit=4
    $region2: #{local_attention_forward.1} parent=1 // loop_pre_header
      _
    $region3: #{local_attention_forward.1} parent=1 // loop_header
      %s20 = sphi 0, %s24
      %p21 = scmp.ge.s32.totalorder %s20, 4
      %s30 = sphi 0, %s32
      %s33 = sphi 0, %s30
      %s34 = sphi 0, %s33
      %s50 = sphi 0, %s34
      %s54 = sphi 0, %s54
      %s56 = sphi 0, %s54
      %s57 = sphi 0, %s56
      %s71 = sphi 0, %s57
      %s75 = sphi 0, %s75
      %s77 = sphi 0, %s75
      %s78 = sphi 0, %s77
      %s92 = sphi 0, %s78
      %s96 = sphi 0, %s96
      %s98 = sphi 0, %s96
      %s99 = sphi 0, %s98
      %s113 = sphi 0, %s99
      %s117 = sphi 0, %s117
      %s119 = sphi 0, %s117
      %s120 = sphi 0, %s119
      %s134 = sphi 0, %s120
      %s138 = sphi 0, %s138
      %s140 = sphi 0, %s138
      %s141 = sphi 0, %s140
      %s155 = sphi 0, %s141
      %s161 = sphi 0, %s163
      %s164 = sphi 0, %s161
      %s165 = sphi 0, %s164
      %s181 = sphi 0, %s165
    $region4: #{local_attention_forward.1} parent=1 // loop_header_branch
      %23 = sbr.rel (%p21) target = $region8
    $region5: #{local_attention_forward.1} parent=1 // loop_body
      %s25 = ssub.s32 %s20, 1
      %s26 = ssub.s32 %s20, 2
      %s27 = sadd.s32 %s20, 1
      %s28 = ssub.s32 %s20, %s27
      %p29 = scmp.eq.s32.totalorder %s28, 0
      %s31 = sadd.s32 %s30, 1
      %s32 = scalar_select %p29, %s30, %s31
      %p35 = pneg %p29
      %p36 = scmp.eq.s32.totalorder %s20, 1
      %p37 = por %p35, %p36
      %p38 = scmp.ne.s32.totalorder %s30, %s33
      %p39 = scmp.eq.s32.totalorder %s20, 0
      %p40 = por %p38, %p39
      %p41 = scmp.ne.s32.totalorder %s30, %s33
      %p42 = scmp.eq.s32.totalorder %s25, 1
      %p43 = por %p41, %p42
      %p44 = scmp.ne.s32.totalorder %s33, %s34
      %p45 = scmp.eq.s32.totalorder %s25, 0
      %p46 = por %p44, %p45
      %p47 = scmp.ne.s32.totalorder %s33, %s34
      %p48 = scmp.eq.s32.totalorder %s26, 1
      %p49 = por %p47, %p48
      %p51 = scmp.ne.s32.totalorder %s34, %s50
      %p52 = scmp.eq.s32.totalorder %s26, 0
      %p53 = por %p51, %p52
      %s55 = sadd.s32 %s54, 1
      %p58 = scmp.eq.s32.totalorder %s20, 1
      %p59 = scmp.ne.s32.totalorder %s54, %s56
      %p60 = scmp.eq.s32.totalorder %s20, 0
      %p61 = por %p59, %p60
      %p62 = scmp.ne.s32.totalorder %s54, %s56
      %p63 = scmp.eq.s32.totalorder %s25, 1
      %p64 = por %p62, %p63
      %p65 = scmp.ne.s32.totalorder %s56, %s57
      %p66 = scmp.eq.s32.totalorder %s25, 0
      %p67 = por %p65, %p66
      %p68 = scmp.ne.s32.totalorder %s56, %s57
      %p69 = scmp.eq.s32.totalorder %s26, 1
      %p70 = por %p68, %p69
      %p72 = scmp.ne.s32.totalorder %s57, %s71
      %p73 = scmp.eq.s32.totalorder %s26, 0
      %p74 = por %p72, %p73
      %s76 = sadd.s32 %s75, 1
      %p79 = scmp.eq.s32.totalorder %s20, 1
      %p80 = scmp.ne.s32.totalorder %s75, %s77
      %p81 = scmp.eq.s32.totalorder %s20, 0
      %p82 = por %p80, %p81
      %p83 = scmp.ne.s32.totalorder %s75, %s77
      %p84 = scmp.eq.s32.totalorder %s25, 1
      %p85 = por %p83, %p84
      %p86 = scmp.ne.s32.totalorder %s77, %s78
      %p87 = scmp.eq.s32.totalorder %s25, 0
      %p88 = por %p86, %p87
      %p89 = scmp.ne.s32.totalorder %s77, %s78
      %p90 = scmp.eq.s32.totalorder %s26, 1
      %p91 = por %p89, %p90
      %p93 = scmp.ne.s32.totalorder %s78, %s92
      %p94 = scmp.eq.s32.totalorder %s26, 0
      %p95 = por %p93, %p94
      %s97 = sadd.s32 %s96, 1
      %p100 = scmp.eq.s32.totalorder %s20, 1
      %p101 = scmp.ne.s32.totalorder %s96, %s98
      %p102 = scmp.eq.s32.totalorder %s20, 0
      %p103 = por %p101, %p102
      %p104 = scmp.ne.s32.totalorder %s96, %s98
      %p105 = scmp.eq.s32.totalorder %s25, 1
      %p106 = por %p104, %p105
      %p107 = scmp.ne.s32.totalorder %s98, %s99
      %p108 = scmp.eq.s32.totalorder %s25, 0
      %p109 = por %p107, %p108
      %p110 = scmp.ne.s32.totalorder %s98, %s99
      %p111 = scmp.eq.s32.totalorder %s26, 1
      %p112 = por %p110, %p111
      %p114 = scmp.ne.s32.totalorder %s99, %s113
      %p115 = scmp.eq.s32.totalorder %s26, 0
      %p116 = por %p114, %p115
      %s118 = sadd.s32 %s117, 1
      %p121 = scmp.eq.s32.totalorder %s20, 1
      %p122 = scmp.ne.s32.totalorder %s117, %s119
      %p123 = scmp.eq.s32.totalorder %s20, 0
      %p124 = por %p122, %p123
      %p125 = scmp.ne.s32.totalorder %s117, %s119
      %p126 = scmp.eq.s32.totalorder %s25, 1
      %p127 = por %p125, %p126
      %p128 = scmp.ne.s32.totalorder %s119, %s120
      %p129 = scmp.eq.s32.totalorder %s25, 0
      %p130 = por %p128, %p129
      %p131 = scmp.ne.s32.totalorder %s119, %s120
      %p132 = scmp.eq.s32.totalorder %s26, 1
      %p133 = por %p131, %p132
      %p135 = scmp.ne.s32.totalorder %s120, %s134
      %p136 = scmp.eq.s32.totalorder %s26, 0
      %p137 = por %p135, %p136
      %s139 = sadd.s32 %s138, 1
      %p142 = scmp.eq.s32.totalorder %s20, 1
      %p143 = scmp.ne.s32.totalorder %s138, %s140
      %p144 = scmp.eq.s32.totalorder %s20, 0
      %p145 = por %p143, %p144
      %p146 = scmp.ne.s32.totalorder %s138, %s140
      %p147 = scmp.eq.s32.totalorder %s25, 1
      %p148 = por %p146, %p147
      %p149 = scmp.ne.s32.totalorder %s140, %s141
      %p150 = scmp.eq.s32.totalorder %s25, 0
      %p151 = por %p149, %p150
      %p152 = scmp.ne.s32.totalorder %s140, %s141
      %p153 = scmp.eq.s32.totalorder %s26, 1
      %p154 = por %p152, %p153
      %p156 = scmp.ne.s32.totalorder %s141, %s155
      %p157 = scmp.eq.s32.totalorder %s26, 0
      %p158 = por %p156, %p157
      %s159 = ssub.s32 %s20, %s27
      %p160 = scmp.eq.s32.totalorder %s159, 0
      %s162 = sadd.s32 %s161, 1
      %s163 = scalar_select %p160, %s161, %s162
      %p166 = pneg %p160
      %p167 = scmp.eq.s32.totalorder %s20, 1
      %p168 = por %p166, %p167
      %p169 = scmp.ne.s32.totalorder %s161, %s164
      %p170 = scmp.eq.s32.totalorder %s20, 0
      %p171 = por %p169, %p170
      %p172 = scmp.ne.s32.totalorder %s161, %s164
      %p173 = scmp.eq.s32.totalorder %s25, 1
      %p174 = por %p172, %p173
      %p175 = scmp.ne.s32.totalorder %s164, %s165
      %p176 = scmp.eq.s32.totalorder %s25, 0
      %p177 = por %p175, %p176
      %p178 = scmp.ne.s32.totalorder %s164, %s165
      %p179 = scmp.eq.s32.totalorder %s26, 1
      %p180 = por %p178, %p179
      %p182 = scmp.ne.s32.totalorder %s165, %s181
      %p183 = scmp.eq.s32.totalorder %s26, 0
      %p184 = por %p182, %p183
      %p185 = scmp.le.s32.totalorder 1, %s20
      %p186 = scmp.lt.s32.totalorder %s20, 3
      %p187 = pnand %p185, %p186
      %p188 = pneg %p187
      // Predicated region
      $region9: #{local_attention_forward.1} parent=5 // pred_check
        _
      $region10: #{local_attention_forward.1} parent=5 // pred_check_branch
        %190 = sbr.rel (%p187) target = $region12
      $region11: #{local_attention_forward.1} parent=5 // pred_region
        %s191 = ssub.s32 %s20, 1
        // Predicated region
        $region13: #{local_attention_forward.1} parent=11 // pred_check
          %p192 = pneg %p67
        $region14: #{local_attention_forward.1} parent=11 // pred_check_branch
          %194 = sbr.rel (%p192) target = $region16
        $region15: #{local_attention_forward.1} parent=11 // pred_region
          %s196 = ssub.s32 1024, 1024
          %197 = vsyncadd [#allocation6], %s196
          %s198 = sshll.u32 [#allocation5], 4
          %s199 = int_to_ptr.vmem [resolvable:$true] %s198
          %204 = dma.hbm_to_vmem [thread:$0]  %s1, 1024, %s199, [#allocation6], 64, 64, 4
        $region16: #{local_attention_forward.1} parent=11 // pred_fallthru
          _
        // Predicated region
        $region17: #{local_attention_forward.1} parent=11 // pred_check
          %p205 = pneg %p88
        $region18: #{local_attention_forward.1} parent=11 // pred_check_branch
          %207 = sbr.rel (%p205) target = $region20
        $region19: #{local_attention_forward.1} parent=11 // pred_region
          %s209 = ssub.s32 1024, 1024
          %210 = vsyncadd [#allocation6], %s209
          %s211 = sshll.u32 [#allocation7], 4
          %s212 = int_to_ptr.vmem [resolvable:$true] %s211
          %217 = dma.hbm_to_vmem [thread:$0]  %s2, 1024, %s212, [#allocation6], 64, 64, 4
        $region20: #{local_attention_forward.1} parent=11 // pred_fallthru
          _
        // Predicated region
        $region21: #{local_attention_forward.1} parent=11 // pred_check
          %p218 = pneg %p109
        $region22: #{local_attention_forward.1} parent=11 // pred_check_branch
          %220 = sbr.rel (%p218) target = $region24
        $region23: #{local_attention_forward.1} parent=11 // pred_region
          _
        $region24: #{local_attention_forward.1} parent=11 // pred_fallthru
          _
        // Predicated region
        $region25: #{local_attention_forward.1} parent=11 // pred_check
          %p221 = pneg %p130
        $region26: #{local_attention_forward.1} parent=11 // pred_check_branch
          %223 = sbr.rel (%p221) target = $region28
        $region27: #{local_attention_forward.1} parent=11 // pred_region
          %s225 = ssub.s32 1024, 1024
          %226 = vsyncadd [#allocation9], %s225
          %s227 = sshll.u32 [#allocation8], 4
          %s228 = int_to_ptr.vmem [resolvable:$true] %s227
          %233 = dma.hbm_to_vmem [thread:$0]  %s4, 1024, %s228, [#allocation9], 64, 64, 4
        $region28: #{local_attention_forward.1} parent=11 // pred_fallthru
          _
        // Predicated region
        $region29: #{local_attention_forward.1} parent=11 // pred_check
          %p234 = pneg %p151
        $region30: #{local_attention_forward.1} parent=11 // pred_check_branch
          %236 = sbr.rel (%p234) target = $region32
        $region31: #{local_attention_forward.1} parent=11 // pred_region
          _
        $region32: #{local_attention_forward.1} parent=11 // pred_fallthru
          _
      $region12: #{local_attention_forward.1} parent=5 // pred_fallthru
        _
      %p237 = scmp.lt.s32.totalorder %s20, 2
      // Predicated region
      $region33: #{local_attention_forward.1} parent=5 // pred_check
        %p238 = pneg %p237
      $region34: #{local_attention_forward.1} parent=5 // pred_check_branch
        %240 = sbr.rel (%p238) target = $region36
      $region35: #{local_attention_forward.1} parent=5 // pred_region
        // Predicated region
        $region37: #{local_attention_forward.1} parent=35 // pred_check
          %p241 = pneg %p40
        $region38: #{local_attention_forward.1} parent=35 // pred_check_branch
          %243 = sbr.rel (%p241) target = $region40
        $region39: #{local_attention_forward.1} parent=35 // pred_region
          %s244 = sand.u32 %s30, 1
          %s245 = scalar_lea.sflag [#allocation3], %s244
          %s246 = sand.u32 %s30, 1
          %s247 = smul.addr %s246, 256
          %s248 = scalar_lea.vmem [#allocation2], %s247
          %s250 = ssub.s32 4096, 4096
          %251 = vsyncadd %s245, %s250
          %s252 = smul.addr %s20, 32
          %s253 = smul.addr %s252, 128
          %s254 = scalar_lea.hbm %s0, %s253
          %s255 = sshll.u32 %s248, 4
          %s256 = int_to_ptr.vmem [resolvable:$true] %s255
          %261 = dma.hbm_to_vmem [thread:$0]  %s254, 4096, %s256, %s245, 128, 128, 8
        $region40: #{local_attention_forward.1} parent=35 // pred_fallthru
          _
      $region36: #{local_attention_forward.1} parent=5 // pred_fallthru
        _
      %p262 = scmp.le.s32.totalorder 1, %s20
      %p263 = scmp.lt.s32.totalorder %s20, 3
      %p264 = pnand %p262, %p263
      %p265 = pneg %p264
      // Predicated region
      $region41: #{local_attention_forward.1} parent=5 // pred_check
        _
      $region42: #{local_attention_forward.1} parent=5 // pred_check_branch
        %267 = sbr.rel (%p264) target = $region44
      $region43: #{local_attention_forward.1} parent=5 // pred_region
        %s268 = ssub.s32 %s20, 1
        %s269 = sand.u32 %s33, 1
        %s270 = scalar_lea.sflag [#allocation3], %s269
        %s271 = sand.u32 %s33, 1
        %s272 = smul.addr %s271, 256
        %s273 = scalar_lea.vmem [#allocation2], %s272
        // Predicated region
        $region45: #{local_attention_forward.1} parent=43 // pred_check
          %p274 = pneg %p46
        $region46: #{local_attention_forward.1} parent=43 // pred_check_branch
          %276 = sbr.rel (%p274) target = $region48
        $region47: #{local_attention_forward.1} parent=43 // pred_region
          %277 = dma.done %s270, 4096
        $region48: #{local_attention_forward.1} parent=43 // pred_fallthru
          _
        // Predicated region
        $region49: #{local_attention_forward.1} parent=43 // pred_check
          %p278 = pneg %p67
        $region50: #{local_attention_forward.1} parent=43 // pred_check_branch
          %280 = sbr.rel (%p278) target = $region52
        $region51: #{local_attention_forward.1} parent=43 // pred_region
          %281 = dma.done [#allocation6], 1024
        $region52: #{local_attention_forward.1} parent=43 // pred_fallthru
          _
        // Predicated region
        $region53: #{local_attention_forward.1} parent=43 // pred_check
          %p282 = pneg %p88
        $region54: #{local_attention_forward.1} parent=43 // pred_check_branch
          %284 = sbr.rel (%p282) target = $region56
        $region55: #{local_attention_forward.1} parent=43 // pred_region
          %285 = dma.done [#allocation6], 1024
        $region56: #{local_attention_forward.1} parent=43 // pred_fallthru
          _
        // Predicated region
        $region57: #{local_attention_forward.1} parent=43 // pred_check
          %p286 = pneg %p130
        $region58: #{local_attention_forward.1} parent=43 // pred_check_branch
          %288 = sbr.rel (%p286) target = $region60
        $region59: #{local_attention_forward.1} parent=43 // pred_region
          %289 = dma.done [#allocation9], 1024
        $region60: #{local_attention_forward.1} parent=43 // pred_fallthru
          _
        %s290 = sand.u32 %s33, 1
        %s291 = scalar_lea.sflag [#allocation3], %s290
        %s292 = sand.u32 %s33, 1
        %s293 = smul.addr %s292, 256
        %s294 = scalar_lea.vmem [#allocation2], %s293
        %p295 = pneg %p46
        %p296 = pneg %p43
        %p297 = pneg %p67
        %p298 = pneg %p64
        %p299 = pneg %p88
        %p300 = pneg %p85
        %p301 = pneg %p109
        %p302 = pneg %p106
        %p303 = pneg %p130
        %p304 = pneg %p127
        %p305 = pneg %p151
        %p306 = pneg %p148
        %p307 = pneg %p177
        %p308 = pneg %p174
        %s309 = sand.u32 %s164, 1
        %s310 = scalar_lea.sflag [#allocation4], %s309
        %s311 = sand.u32 %s164, 1
        %s312 = smul.addr %s311, 256
        %s313 = scalar_lea.vmem [#allocation10], %s312
        %v315 = vld [vmem:[%s273] sm:$0xff]
        %v316 = vld [vmem:[%s273 + $0x8] sm:$0xff]
        %v317 = vld [vmem:[%s273 + $0x10] sm:$0xff]
        %v318 = vld [vmem:[%s273 + $0x18] sm:$0xff]
        %v319 = vld [vmem:[%s273 + $0x20] sm:$0xff]
        %v320 = vld [vmem:[%s273 + $0x28] sm:$0xff]
        %v321 = vld [vmem:[%s273 + $0x30] sm:$0xff]
        %v322 = vld [vmem:[%s273 + $0x38] sm:$0xff]
        %v323 = vld [vmem:[%s273 + $0x40] sm:$0xff]
        %v324 = vld [vmem:[%s273 + $0x48] sm:$0xff]
        %v325 = vld [vmem:[%s273 + $0x50] sm:$0xff]
        %v326 = vld [vmem:[%s273 + $0x58] sm:$0xff]
        %v327 = vld [vmem:[%s273 + $0x60] sm:$0xff]
        %v328 = vld [vmem:[%s273 + $0x68] sm:$0xff]
        %v329 = vld [vmem:[%s273 + $0x70] sm:$0xff]
        %v330 = vld [vmem:[%s273 + $0x78] sm:$0xff]
        %v331 = vld [vmem:[%s273 + $0x80] sm:$0xff]
        %v332 = vld [vmem:[%s273 + $0x88] sm:$0xff]
        %v333 = vld [vmem:[%s273 + $0x90] sm:$0xff]
        %v334 = vld [vmem:[%s273 + $0x98] sm:$0xff]
        %v335 = vld [vmem:[%s273 + $0xa0] sm:$0xff]
        %v336 = vld [vmem:[%s273 + $0xa8] sm:$0xff]
        %v337 = vld [vmem:[%s273 + $0xb0] sm:$0xff]
        %v338 = vld [vmem:[%s273 + $0xb8] sm:$0xff]
        %v339 = vld [vmem:[%s273 + $0xc0] sm:$0xff]
        %v340 = vld [vmem:[%s273 + $0xc8] sm:$0xff]
        %v341 = vld [vmem:[%s273 + $0xd0] sm:$0xff]
        %v342 = vld [vmem:[%s273 + $0xd8] sm:$0xff]
        %v343 = vld [vmem:[%s273 + $0xe0] sm:$0xff]
        %v344 = vld [vmem:[%s273 + $0xe8] sm:$0xff]
        %v345 = vld [vmem:[%s273 + $0xf0] sm:$0xff]
        %v346 = vld [vmem:[%s273 + $0xf8] sm:$0xff]
        %v347 = vpack.c.bf16 %v316, %v315
        %v348 = vpack.c.bf16 %v318, %v317
        %v349 = vpack.c.bf16 %v320, %v319
        %v350 = vpack.c.bf16 %v322, %v321
        %v351 = vpack.c.bf16 %v324, %v323
        %v352 = vpack.c.bf16 %v326, %v325
        %v353 = vpack.c.bf16 %v328, %v327
        %v354 = vpack.c.bf16 %v330, %v329
        %v355 = vpack.c.bf16 %v332, %v331
        %v356 = vpack.c.bf16 %v334, %v333
        %v357 = vpack.c.bf16 %v336, %v335
        %v358 = vpack.c.bf16 %v338, %v337
        %v359 = vpack.c.bf16 %v340, %v339
        %v360 = vpack.c.bf16 %v342, %v341
        %v361 = vpack.c.bf16 %v344, %v343
        %v362 = vpack.c.bf16 %v346, %v345
        %v363 = vld [vmem:[#allocation5] sm:$0xf]
        %v364 = vld [vmem:[#allocation5 + $0x4] sm:$0xf]
        %v365 = vld [vmem:[#allocation5 + $0x8] sm:$0xf]
        %v366 = vld [vmem:[#allocation5 + $0xc] sm:$0xf]
        %v367 = vld [vmem:[#allocation5 + $0x10] sm:$0xf]
        %v368 = vld [vmem:[#allocation5 + $0x14] sm:$0xf]
        %v369 = vld [vmem:[#allocation5 + $0x18] sm:$0xf]
        %v370 = vld [vmem:[#allocation5 + $0x1c] sm:$0xf]
        %v371 = vld [vmem:[#allocation5 + $0x20] sm:$0xf]
        %v372 = vld [vmem:[#allocation5 + $0x24] sm:$0xf]
        %v373 = vld [vmem:[#allocation5 + $0x28] sm:$0xf]
        %v374 = vld [vmem:[#allocation5 + $0x2c] sm:$0xf]
        %v375 = vld [vmem:[#allocation5 + $0x30] sm:$0xf]
        %v376 = vld [vmem:[#allocation5 + $0x34] sm:$0xf]
        %v377 = vld [vmem:[#allocation5 + $0x38] sm:$0xf]
        %v378 = vld [vmem:[#allocation5 + $0x3c] sm:$0xf]
        %v395 = vunpack.c.l.b16 %v363
        %v396 = vunpack.c.l.b16 %v364
        %v397 = vunpack.c.l.b16 %v365
        %v398 = vunpack.c.l.b16 %v366
        %v399 = vunpack.c.l.b16 %v367
        %v400 = vunpack.c.l.b16 %v368
        %v401 = vunpack.c.l.b16 %v369
        %v402 = vunpack.c.l.b16 %v370
        %v403 = vunpack.c.l.b16 %v371
        %v404 = vunpack.c.l.b16 %v372
        %v405 = vunpack.c.l.b16 %v373
        %v406 = vunpack.c.l.b16 %v374
        %v407 = vunpack.c.l.b16 %v375
        %v408 = vunpack.c.l.b16 %v376
        %v409 = vunpack.c.l.b16 %v377
        %v410 = vunpack.c.l.b16 %v378
        %v411 = vpack.c.b16 %v396, %v395
        %v412 = vpack.c.b16 %v398, %v397
        %v413 = vpack.c.b16 %v400, %v399
        %v414 = vpack.c.b16 %v402, %v401
        %v415 = vpack.c.b16 %v404, %v403
        %v416 = vpack.c.b16 %v406, %v405
        %v417 = vpack.c.b16 %v408, %v407
        %v418 = vpack.c.b16 %v410, %v409
        %427 = vmatprep.subr.bf16.mxu0 0
        %428 = vmatpush1.bf16.msra.mxu0 %v411
        %429 = vmatprep.subr.bf16.mxu0 0
        %430 = vmatpush1.bf16.msra.mxu0 %v412
        %431 = vmatprep.subr.bf16.mxu0 0
        %432 = vmatpush1.bf16.msra.mxu0 %v413
        %433 = vmatprep.subr.bf16.mxu0 0
        %434 = vmatpush1.bf16.msra.mxu0 %v414
        %435 = vmatprep.subr.bf16.mxu0 0
        %436 = vmatpush1.bf16.msra.mxu0 %v415
        %437 = vmatprep.subr.bf16.mxu0 0
        %438 = vmatpush1.bf16.msra.mxu0 %v416
        %439 = vmatprep.subr.bf16.mxu0 0
        %440 = vmatpush1.bf16.msra.mxu0 %v417
        %441 = vmatprep.subr.bf16.mxu0 0
        %442 = vmatpush1.bf16.msra.mxu0 %v418
        %443 = vmatprep.subr.bf16.mxu0 0
        %444 = vmatpush1.bf16.msra.mxu0 0
        %445 = vmatprep.subr.bf16.mxu0 0
        %446 = vmatpush1.bf16.msra.mxu0 0
        %447 = vmatprep.subr.bf16.mxu0 0
        %448 = vmatpush1.bf16.msra.mxu0 0
        %449 = vmatprep.subr.bf16.mxu0 0
        %450 = vmatpush1.bf16.msra.mxu0 0
        %451 = vmatprep.subr.bf16.mxu0 0
        %452 = vmatpush1.bf16.msra.mxu0 0
        %453 = vmatprep.subr.bf16.mxu0 0
        %454 = vmatpush1.bf16.msra.mxu0 0
        %455 = vmatprep.subr.bf16.mxu0 0
        %456 = vmatpush1.bf16.msra.mxu0 0
        %457 = vmatprep.subr.bf16.mxu0 0
        %458 = vmatpush1.bf16.msra.mxu0 0
        %459 = vmatprep.mubr.bf16.mxu0 0
        %460 = vmatmul.mubr.bf16.gmra.mrb[0].mxu0 %v347
        %v461 = vpop.f32.mrb[0].mxu0
        %v462 = vadd.f32 0.0, %v461
        %v463 = vpop.f32.mrb[0].mxu0
        %v464 = vpop.f32.mrb[0].mxu0
        %v465 = vadd.f32 0.0, %v464
        %v466 = vpop.f32.mrb[0].mxu0
        %467 = vmatprep.mubr.bf16.mxu0 0
        %468 = vmatmul.mubr.bf16.gmra.mrb[0].mxu0 %v348
        %v469 = vpop.f32.mrb[0].mxu0
        %v470 = vadd.f32 0.0, %v469
        %v471 = vpop.f32.mrb[0].mxu0
        %v472 = vpop.f32.mrb[0].mxu0
        %v473 = vadd.f32 0.0, %v472
        %v474 = vpop.f32.mrb[0].mxu0
        %475 = vmatprep.mubr.bf16.mxu0 0
        %476 = vmatmul.mubr.bf16.gmra.mrb[0].mxu0 %v349
        %v477 = vpop.f32.mrb[0].mxu0
        %v478 = vadd.f32 0.0, %v477
        %v479 = vpop.f32.mrb[0].mxu0
        %v480 = vpop.f32.mrb[0].mxu0
        %v481 = vadd.f32 0.0, %v480
        %v482 = vpop.f32.mrb[0].mxu0
        %483 = vmatprep.mubr.bf16.mxu0 0
        %484 = vmatmul.mubr.bf16.gmra.mrb[0].mxu0 %v350
        %v485 = vpop.f32.mrb[0].mxu0
        %v486 = vadd.f32 0.0, %v485
        %v487 = vpop.f32.mrb[0].mxu0
        %v488 = vpop.f32.mrb[0].mxu0
        %v489 = vadd.f32 0.0, %v488
        %v490 = vpop.f32.mrb[0].mxu0
        %491 = vmatprep.mubr.bf16.mxu0 0
        %492 = vmatmul.mubr.bf16.gmra.mrb[0].mxu0 %v351
        %v493 = vpop.f32.mrb[0].mxu0
        %v494 = vadd.f32 0.0, %v493
        %v495 = vpop.f32.mrb[0].mxu0
        %v496 = vpop.f32.mrb[0].mxu0
        %v497 = vadd.f32 0.0, %v496
        %v498 = vpop.f32.mrb[0].mxu0
        %499 = vmatprep.mubr.bf16.mxu0 0
        %500 = vmatmul.mubr.bf16.gmra.mrb[0].mxu0 %v352
        %v501 = vpop.f32.mrb[0].mxu0
        %v502 = vadd.f32 0.0, %v501
        %v503 = vpop.f32.mrb[0].mxu0
        %v504 = vpop.f32.mrb[0].mxu0
        %v505 = vadd.f32 0.0, %v504
        %v506 = vpop.f32.mrb[0].mxu0
        %507 = vmatprep.mubr.bf16.mxu0 0
        %508 = vmatmul.mubr.bf16.gmra.mrb[0].mxu0 %v353
        %v509 = vpop.f32.mrb[0].mxu0
        %v510 = vadd.f32 0.0, %v509
        %v511 = vpop.f32.mrb[0].mxu0
        %v512 = vpop.f32.mrb[0].mxu0
        %v513 = vadd.f32 0.0, %v512
        %v514 = vpop.f32.mrb[0].mxu0
        %515 = vmatprep.mubr.bf16.mxu0 0
        %516 = vmatmul.mubr.bf16.gmra.mrb[0].mxu0 %v354
        %v517 = vpop.f32.mrb[0].mxu0
        %v518 = vadd.f32 0.0, %v517
        %v519 = vpop.f32.mrb[0].mxu0
        %v520 = vpop.f32.mrb[0].mxu0
        %v521 = vadd.f32 0.0, %v520
        %v522 = vpop.f32.mrb[0].mxu0
        %523 = vmatprep.mubr.bf16.mxu0 0
        %524 = vmatmul.mubr.bf16.gmra.mrb[0].mxu0 %v355
        %v525 = vpop.f32.mrb[0].mxu0
        %v526 = vadd.f32 0.0, %v525
        %v527 = vpop.f32.mrb[0].mxu0
        %v528 = vpop.f32.mrb[0].mxu0
        %v529 = vadd.f32 0.0, %v528
        %v530 = vpop.f32.mrb[0].mxu0
        %531 = vmatprep.mubr.bf16.mxu0 0
        %532 = vmatmul.mubr.bf16.gmra.mrb[0].mxu0 %v356
        %v533 = vpop.f32.mrb[0].mxu0
        %v534 = vadd.f32 0.0, %v533
        %v535 = vpop.f32.mrb[0].mxu0
        %v536 = vpop.f32.mrb[0].mxu0
        %v537 = vadd.f32 0.0, %v536
        %v538 = vpop.f32.mrb[0].mxu0
        %539 = vmatprep.mubr.bf16.mxu0 0
        %540 = vmatmul.mubr.bf16.gmra.mrb[0].mxu0 %v357
        %v541 = vpop.f32.mrb[0].mxu0
        %v542 = vadd.f32 0.0, %v541
        %v543 = vpop.f32.mrb[0].mxu0
        %v544 = vpop.f32.mrb[0].mxu0
        %v545 = vadd.f32 0.0, %v544
        %v546 = vpop.f32.mrb[0].mxu0
        %547 = vmatprep.mubr.bf16.mxu0 0
        %548 = vmatmul.mubr.bf16.gmra.mrb[0].mxu0 %v358
        %v549 = vpop.f32.mrb[0].mxu0
        %v550 = vadd.f32 0.0, %v549
        %v551 = vpop.f32.mrb[0].mxu0
        %v552 = vpop.f32.mrb[0].mxu0
        %v553 = vadd.f32 0.0, %v552
        %v554 = vpop.f32.mrb[0].mxu0
        %555 = vmatprep.mubr.bf16.mxu0 0
        %556 = vmatmul.mubr.bf16.gmra.mrb[0].mxu0 %v359
        %v557 = vpop.f32.mrb[0].mxu0
        %v558 = vadd.f32 0.0, %v557
        %v559 = vpop.f32.mrb[0].mxu0
        %v560 = vpop.f32.mrb[0].mxu0
        %v561 = vadd.f32 0.0, %v560
        %v562 = vpop.f32.mrb[0].mxu0
        %563 = vmatprep.mubr.bf16.mxu0 0
        %564 = vmatmul.mubr.bf16.gmra.mrb[0].mxu0 %v360
        %v565 = vpop.f32.mrb[0].mxu0
        %v566 = vadd.f32 0.0, %v565
        %v567 = vpop.f32.mrb[0].mxu0
        %v568 = vpop.f32.mrb[0].mxu0
        %v569 = vadd.f32 0.0, %v568
        %v570 = vpop.f32.mrb[0].mxu0
        %571 = vmatprep.mubr.bf16.mxu0 0
        %572 = vmatmul.mubr.bf16.gmra.mrb[0].mxu0 %v361
        %v573 = vpop.f32.mrb[0].mxu0
        %v574 = vadd.f32 0.0, %v573
        %v575 = vpop.f32.mrb[0].mxu0
        %v576 = vpop.f32.mrb[0].mxu0
        %v577 = vadd.f32 0.0, %v576
        %v578 = vpop.f32.mrb[0].mxu0
        %579 = vmatprep.mubr.bf16.mxu0 0
        %580 = vmatmul.mubr.bf16.gmra.mrb[0].mxu0 %v362
        %v581 = vpop.f32.mrb[0].mxu0
        %v582 = vadd.f32 0.0, %v581
        %v583 = vpop.f32.mrb[0].mxu0
        %v584 = vpop.f32.mrb[0].mxu0
        %v585 = vadd.f32 0.0, %v584
        %v586 = vpop.f32.mrb[0].mxu0
        %587 = vdwg.mxu0
        %v588 = vpack.c.bf16 %v465, %v462
        %v589 = vpack.c.bf16 %v473, %v470
        %v590 = vpack.c.bf16 %v481, %v478
        %v591 = vpack.c.bf16 %v489, %v486
        %v592 = vpack.c.bf16 %v497, %v494
        %v593 = vpack.c.bf16 %v505, %v502
        %v594 = vpack.c.bf16 %v513, %v510
        %v595 = vpack.c.bf16 %v521, %v518
        %v596 = vpack.c.bf16 %v529, %v526
        %v597 = vpack.c.bf16 %v537, %v534
        %v598 = vpack.c.bf16 %v545, %v542
        %v599 = vpack.c.bf16 %v553, %v550
        %v600 = vpack.c.bf16 %v561, %v558
        %v601 = vpack.c.bf16 %v569, %v566
        %v602 = vpack.c.bf16 %v577, %v574
        %v603 = vpack.c.bf16 %v585, %v582
        %v604 = vld [vmem:[#allocation7] sm:$0xf]
        %v605 = vld [vmem:[#allocation7 + $0x4] sm:$0xf]
        %v606 = vld [vmem:[#allocation7 + $0x8] sm:$0xf]
        %v607 = vld [vmem:[#allocation7 + $0xc] sm:$0xf]
        %v608 = vld [vmem:[#allocation7 + $0x10] sm:$0xf]
        %v609 = vld [vmem:[#allocation7 + $0x14] sm:$0xf]
        %v610 = vld [vmem:[#allocation7 + $0x18] sm:$0xf]
        %v611 = vld [vmem:[#allocation7 + $0x1c] sm:$0xf]
        %v612 = vld [vmem:[#allocation7 + $0x20] sm:$0xf]
        %v613 = vld [vmem:[#allocation7 + $0x24] sm:$0xf]
        %v614 = vld [vmem:[#allocation7 + $0x28] sm:$0xf]
        %v615 = vld [vmem:[#allocation7 + $0x2c] sm:$0xf]
        %v616 = vld [vmem:[#allocation7 + $0x30] sm:$0xf]
        %v617 = vld [vmem:[#allocation7 + $0x34] sm:$0xf]
        %v618 = vld [vmem:[#allocation7 + $0x38] sm:$0xf]
        %v619 = vld [vmem:[#allocation7 + $0x3c] sm:$0xf]
        %v620 = vld [vmem:[%s3] sm:$0x1]
        %v622 = vlaneseq
        %v623 = vshrl.u32 %v622, 7
        %v624 = vsub.s32 0, %v623
        %v625 = vrot.slane %v620, %v624
        %v643 = vunpack.c.l.b16 %v604
        %v644 = vunpack.c.l.b16 %v605
        %v645 = vunpack.c.l.b16 %v606
        %v646 = vunpack.c.l.b16 %v607
        %v647 = vunpack.c.l.b16 %v608
        %v648 = vunpack.c.l.b16 %v609
        %v649 = vunpack.c.l.b16 %v610
        %v650 = vunpack.c.l.b16 %v611
        %v651 = vunpack.c.l.b16 %v612
        %v652 = vunpack.c.l.b16 %v613
        %v653 = vunpack.c.l.b16 %v614
        %v654 = vunpack.c.l.b16 %v615
        %v655 = vunpack.c.l.b16 %v616
        %v656 = vunpack.c.l.b16 %v617
        %v657 = vunpack.c.l.b16 %v618
        %v658 = vunpack.c.l.b16 %v619
        %v659 = vpack.c.b16 %v644, %v643
        %v660 = vpack.c.b16 %v646, %v645
        %v661 = vpack.c.b16 %v648, %v647
        %v662 = vpack.c.b16 %v650, %v649
        %v663 = vpack.c.b16 %v652, %v651
        %v664 = vpack.c.b16 %v654, %v653
        %v665 = vpack.c.b16 %v656, %v655
        %v666 = vpack.c.b16 %v658, %v657
        %675 = vmatprep.subr.bf16.mxu0 0
        %676 = vmatpush1.bf16.msra.mxu0 %v659
        %677 = vmatprep.subr.bf16.mxu0 0
        %678 = vmatpush1.bf16.msra.mxu0 %v660
        %679 = vmatprep.subr.bf16.mxu0 0
        %680 = vmatpush1.bf16.msra.mxu0 %v661
        %681 = vmatprep.subr.bf16.mxu0 0
        %682 = vmatpush1.bf16.msra.mxu0 %v662
        %683 = vmatprep.subr.bf16.mxu0 0
        %684 = vmatpush1.bf16.msra.mxu0 %v663
        %685 = vmatprep.subr.bf16.mxu0 0
        %686 = vmatpush1.bf16.msra.mxu0 %v664
        %687 = vmatprep.subr.bf16.mxu0 0
        %688 = vmatpush1.bf16.msra.mxu0 %v665
        %689 = vmatprep.subr.bf16.mxu0 0
        %690 = vmatpush1.bf16.msra.mxu0 %v666
        %691 = vmatprep.subr.bf16.mxu0 0
        %692 = vmatpush1.bf16.msra.mxu0 0
        %693 = vmatprep.subr.bf16.mxu0 0
        %694 = vmatpush1.bf16.msra.mxu0 0
        %695 = vmatprep.subr.bf16.mxu0 0
        %696 = vmatpush1.bf16.msra.mxu0 0
        %697 = vmatprep.subr.bf16.mxu0 0
        %698 = vmatpush1.bf16.msra.mxu0 0
        %699 = vmatprep.subr.bf16.mxu0 0
        %700 = vmatpush1.bf16.msra.mxu0 0
        %701 = vmatprep.subr.bf16.mxu0 0
        %702 = vmatpush1.bf16.msra.mxu0 0
        %703 = vmatprep.subr.bf16.mxu0 0
        %704 = vmatpush1.bf16.msra.mxu0 0
        %705 = vmatprep.subr.bf16.mxu0 0
        %706 = vmatpush1.bf16.msra.mxu0 0
        %707 = vmatprep.mubr.bf16.mxu0 0
        %708 = vmatmul.mubr.bf16.gmra.mrb[0].mxu0 %v347
        %v709 = vpop.f32.mrb[0].mxu0
        %v710 = vadd.f32 %v625, %v709
        %v711 = vpop.f32.mrb[0].mxu0
        %v712 = vpop.f32.mrb[0].mxu0
        %v713 = vadd.f32 %v625, %v712
        %v714 = vpop.f32.mrb[0].mxu0
        %715 = vmatprep.mubr.bf16.mxu0 0
        %716 = vmatmul.mubr.bf16.gmra.mrb[0].mxu0 %v348
        %v717 = vpop.f32.mrb[0].mxu0
        %v718 = vadd.f32 %v625, %v717
        %v719 = vpop.f32.mrb[0].mxu0
        %v720 = vpop.f32.mrb[0].mxu0
        %v721 = vadd.f32 %v625, %v720
        %v722 = vpop.f32.mrb[0].mxu0
        %723 = vmatprep.mubr.bf16.mxu0 0
        %724 = vmatmul.mubr.bf16.gmra.mrb[0].mxu0 %v349
        %v725 = vpop.f32.mrb[0].mxu0
        %v726 = vadd.f32 %v625, %v725
        %v727 = vpop.f32.mrb[0].mxu0
        %v728 = vpop.f32.mrb[0].mxu0
        %v729 = vadd.f32 %v625, %v728
        %v730 = vpop.f32.mrb[0].mxu0
        %731 = vmatprep.mubr.bf16.mxu0 0
        %732 = vmatmul.mubr.bf16.gmra.mrb[0].mxu0 %v350
        %v733 = vpop.f32.mrb[0].mxu0
        %v734 = vadd.f32 %v625, %v733
        %v735 = vpop.f32.mrb[0].mxu0
        %v736 = vpop.f32.mrb[0].mxu0
        %v737 = vadd.f32 %v625, %v736
        %v738 = vpop.f32.mrb[0].mxu0
        %739 = vmatprep.mubr.bf16.mxu0 0
        %740 = vmatmul.mubr.bf16.gmra.mrb[0].mxu0 %v351
        %v741 = vpop.f32.mrb[0].mxu0
        %v742 = vadd.f32 %v625, %v741
        %v743 = vpop.f32.mrb[0].mxu0
        %v744 = vpop.f32.mrb[0].mxu0
        %v745 = vadd.f32 %v625, %v744
        %v746 = vpop.f32.mrb[0].mxu0
        %747 = vmatprep.mubr.bf16.mxu0 0
        %748 = vmatmul.mubr.bf16.gmra.mrb[0].mxu0 %v352
        %v749 = vpop.f32.mrb[0].mxu0
        %v750 = vadd.f32 %v625, %v749
        %v751 = vpop.f32.mrb[0].mxu0
        %v752 = vpop.f32.mrb[0].mxu0
        %v753 = vadd.f32 %v625, %v752
        %v754 = vpop.f32.mrb[0].mxu0
        %755 = vmatprep.mubr.bf16.mxu0 0
        %756 = vmatmul.mubr.bf16.gmra.mrb[0].mxu0 %v353
        %v757 = vpop.f32.mrb[0].mxu0
        %v758 = vadd.f32 %v625, %v757
        %v759 = vpop.f32.mrb[0].mxu0
        %v760 = vpop.f32.mrb[0].mxu0
        %v761 = vadd.f32 %v625, %v760
        %v762 = vpop.f32.mrb[0].mxu0
        %763 = vmatprep.mubr.bf16.mxu0 0
        %764 = vmatmul.mubr.bf16.gmra.mrb[0].mxu0 %v354
        %v765 = vpop.f32.mrb[0].mxu0
        %v766 = vadd.f32 %v625, %v765
        %v767 = vpop.f32.mrb[0].mxu0
        %v768 = vpop.f32.mrb[0].mxu0
        %v769 = vadd.f32 %v625, %v768
        %v770 = vpop.f32.mrb[0].mxu0
        %771 = vmatprep.mubr.bf16.mxu0 0
        %772 = vmatmul.mubr.bf16.gmra.mrb[0].mxu0 %v355
        %v773 = vpop.f32.mrb[0].mxu0
        %v774 = vadd.f32 %v625, %v773
        %v775 = vpop.f32.mrb[0].mxu0
        %v776 = vpop.f32.mrb[0].mxu0
        %v777 = vadd.f32 %v625, %v776
        %v778 = vpop.f32.mrb[0].mxu0
        %779 = vmatprep.mubr.bf16.mxu0 0
        %780 = vmatmul.mubr.bf16.gmra.mrb[0].mxu0 %v356
        %v781 = vpop.f32.mrb[0].mxu0
        %v782 = vadd.f32 %v625, %v781
        %v783 = vpop.f32.mrb[0].mxu0
        %v784 = vpop.f32.mrb[0].mxu0
        %v785 = vadd.f32 %v625, %v784
        %v786 = vpop.f32.mrb[0].mxu0
        %787 = vmatprep.mubr.bf16.mxu0 0
        %788 = vmatmul.mubr.bf16.gmra.mrb[0].mxu0 %v357
        %v789 = vpop.f32.mrb[0].mxu0
        %v790 = vadd.f32 %v625, %v789
        %v791 = vpop.f32.mrb[0].mxu0
        %v792 = vpop.f32.mrb[0].mxu0
        %v793 = vadd.f32 %v625, %v792
        %v794 = vpop.f32.mrb[0].mxu0
        %795 = vmatprep.mubr.bf16.mxu0 0
        %796 = vmatmul.mubr.bf16.gmra.mrb[0].mxu0 %v358
        %v797 = vpop.f32.mrb[0].mxu0
        %v798 = vadd.f32 %v625, %v797
        %v799 = vpop.f32.mrb[0].mxu0
        %v800 = vpop.f32.mrb[0].mxu0
        %v801 = vadd.f32 %v625, %v800
        %v802 = vpop.f32.mrb[0].mxu0
        %803 = vmatprep.mubr.bf16.mxu0 0
        %804 = vmatmul.mubr.bf16.gmra.mrb[0].mxu0 %v359
        %v805 = vpop.f32.mrb[0].mxu0
        %v806 = vadd.f32 %v625, %v805
        %v807 = vpop.f32.mrb[0].mxu0
        %v808 = vpop.f32.mrb[0].mxu0
        %v809 = vadd.f32 %v625, %v808
        %v810 = vpop.f32.mrb[0].mxu0
        %811 = vmatprep.mubr.bf16.mxu0 0
        %812 = vmatmul.mubr.bf16.gmra.mrb[0].mxu0 %v360
        %v813 = vpop.f32.mrb[0].mxu0
        %v814 = vadd.f32 %v625, %v813
        %v815 = vpop.f32.mrb[0].mxu0
        %v816 = vpop.f32.mrb[0].mxu0
        %v817 = vadd.f32 %v625, %v816
        %v818 = vpop.f32.mrb[0].mxu0
        %819 = vmatprep.mubr.bf16.mxu0 0
        %820 = vmatmul.mubr.bf16.gmra.mrb[0].mxu0 %v361
        %v821 = vpop.f32.mrb[0].mxu0
        %v822 = vadd.f32 %v625, %v821
        %v823 = vpop.f32.mrb[0].mxu0
        %v824 = vpop.f32.mrb[0].mxu0
        %v825 = vadd.f32 %v625, %v824
        %v826 = vpop.f32.mrb[0].mxu0
        %827 = vmatprep.mubr.bf16.mxu0 0
        %828 = vmatmul.mubr.bf16.gmra.mrb[0].mxu0 %v362
        %v829 = vpop.f32.mrb[0].mxu0
        %v830 = vadd.f32 %v625, %v829
        %v831 = vpop.f32.mrb[0].mxu0
        %v832 = vpop.f32.mrb[0].mxu0
        %v833 = vadd.f32 %v625, %v832
        %v834 = vpop.f32.mrb[0].mxu0
        %835 = vdwg.mxu0
        %v836 = vpack.c.bf16 %v713, %v710
        %v837 = vpack.c.bf16 %v721, %v718
        %v838 = vpack.c.bf16 %v729, %v726
        %v839 = vpack.c.bf16 %v737, %v734
        %v840 = vpack.c.bf16 %v745, %v742
        %v841 = vpack.c.bf16 %v753, %v750
        %v842 = vpack.c.bf16 %v761, %v758
        %v843 = vpack.c.bf16 %v769, %v766
        %v844 = vpack.c.bf16 %v777, %v774
        %v845 = vpack.c.bf16 %v785, %v782
        %v846 = vpack.c.bf16 %v793, %v790
        %v847 = vpack.c.bf16 %v801, %v798
        %v848 = vpack.c.bf16 %v809, %v806
        %v849 = vpack.c.bf16 %v817, %v814
        %v850 = vpack.c.bf16 %v825, %v822
        %v851 = vpack.c.bf16 %v833, %v830
        %852 = vmatprep.subr.bf16.mxu0 0
        %853 = vmatpush1.bf16.xpose.msra.mxu0 %v588
        %854 = vmatprep.subr.bf16.mxu0 0
        %855 = vmatpush1.bf16.xpose.msra.mxu0 %v589
        %856 = vmatprep.subr.bf16.mxu0 0
        %857 = vmatpush1.bf16.xpose.msra.mxu0 %v590
        %858 = vmatprep.subr.bf16.mxu0 0
        %859 = vmatpush1.bf16.xpose.msra.mxu0 %v591
        %860 = vmatprep.subr.bf16.mxu0 0
        %861 = vmatpush1.bf16.xpose.msra.mxu0 %v592
        %862 = vmatprep.subr.bf16.mxu0 0
        %863 = vmatpush1.bf16.xpose.msra.mxu0 %v593
        %864 = vmatprep.subr.bf16.mxu0 0
        %865 = vmatpush1.bf16.xpose.msra.mxu0 %v594
        %866 = vmatprep.subr.bf16.mxu0 0
        %867 = vmatpush1.bf16.xpose.msra.mxu0 %v595
        %868 = vmatprep.subr.bf16.mxu0 0
        %869 = vmatpush1.bf16.xpose.msra.mxu0 %v596
        %870 = vmatprep.subr.bf16.mxu0 0
        %871 = vmatpush1.bf16.xpose.msra.mxu0 %v597
        %872 = vmatprep.subr.bf16.mxu0 0
        %873 = vmatpush1.bf16.xpose.msra.mxu0 %v598
        %874 = vmatprep.subr.bf16.mxu0 0
        %875 = vmatpush1.bf16.xpose.msra.mxu0 %v599
        %876 = vmatprep.subr.bf16.mxu0 0
        %877 = vmatpush1.bf16.xpose.msra.mxu0 %v600
        %878 = vmatprep.subr.bf16.mxu0 0
        %879 = vmatpush1.bf16.xpose.msra.mxu0 %v601
        %880 = vmatprep.subr.bf16.mxu0 0
        %881 = vmatpush1.bf16.xpose.msra.mxu0 %v602
        %882 = vmatprep.subr.bf16.mxu0 0
        %883 = vmatpush1.bf16.xpose.msra.mxu0 %v603
        %884 = vmatprep.mubr.bf16.mxu0 0
        %885 = vmatmul.mubr.bf16.gmra.mrb[0].mxu0 %v588
        %v886 = vpop.f32.mrb[0].mxu0
        %v887 = vadd.f32 0.0, %v886
        %v888 = vpop.f32.mrb[0].mxu0
        %v889 = vadd.f32 0.0, %v888
        %v890 = vpop.f32.mrb[0].mxu0
        %v891 = vadd.f32 0.0, %v890
        %v892 = vpop.f32.mrb[0].mxu0
        %v893 = vadd.f32 0.0, %v892
        %894 = vmatprep.mubr.bf16.mxu0 0
        %895 = vmatmul.mubr.bf16.gmra.mrb[0].mxu0 %v589
        %v896 = vpop.f32.mrb[0].mxu0
        %v897 = vadd.f32 0.0, %v896
        %v898 = vpop.f32.mrb[0].mxu0
        %v899 = vadd.f32 0.0, %v898
        %v900 = vpop.f32.mrb[0].mxu0
        %v901 = vadd.f32 0.0, %v900
        %v902 = vpop.f32.mrb[0].mxu0
        %v903 = vadd.f32 0.0, %v902
        %904 = vmatprep.mubr.bf16.mxu0 0
        %905 = vmatmul.mubr.bf16.gmra.mrb[0].mxu0 %v590
        %v906 = vpop.f32.mrb[0].mxu0
        %v907 = vadd.f32 0.0, %v906
        %v908 = vpop.f32.mrb[0].mxu0
        %v909 = vadd.f32 0.0, %v908
        %v910 = vpop.f32.mrb[0].mxu0
        %v911 = vadd.f32 0.0, %v910
        %v912 = vpop.f32.mrb[0].mxu0
        %v913 = vadd.f32 0.0, %v912
        %914 = vmatprep.mubr.bf16.mxu0 0
        %915 = vmatmul.mubr.bf16.gmra.mrb[0].mxu0 %v591
        %v916 = vpop.f32.mrb[0].mxu0
        %v917 = vadd.f32 0.0, %v916
        %v918 = vpop.f32.mrb[0].mxu0
        %v919 = vadd.f32 0.0, %v918
        %v920 = vpop.f32.mrb[0].mxu0
        %v921 = vadd.f32 0.0, %v920
        %v922 = vpop.f32.mrb[0].mxu0
        %v923 = vadd.f32 0.0, %v922
        %924 = vmatprep.mubr.bf16.mxu0 0
        %925 = vmatmul.mubr.bf16.gmra.mrb[0].mxu0 %v592
        %v926 = vpop.f32.mrb[0].mxu0
        %v927 = vadd.f32 0.0, %v926
        %v928 = vpop.f32.mrb[0].mxu0
        %v929 = vadd.f32 0.0, %v928
        %v930 = vpop.f32.mrb[0].mxu0
        %v931 = vadd.f32 0.0, %v930
        %v932 = vpop.f32.mrb[0].mxu0
        %v933 = vadd.f32 0.0, %v932
        %934 = vmatprep.mubr.bf16.mxu0 0
        %935 = vmatmul.mubr.bf16.gmra.mrb[0].mxu0 %v593
        %v936 = vpop.f32.mrb[0].mxu0
        %v937 = vadd.f32 0.0, %v936
        %v938 = vpop.f32.mrb[0].mxu0
        %v939 = vadd.f32 0.0, %v938
        %v940 = vpop.f32.mrb[0].mxu0
        %v941 = vadd.f32 0.0, %v940
        %v942 = vpop.f32.mrb[0].mxu0
        %v943 = vadd.f32 0.0, %v942
        %944 = vmatprep.mubr.bf16.mxu0 0
        %945 = vmatmul.mubr.bf16.gmra.mrb[0].mxu0 %v594
        %v946 = vpop.f32.mrb[0].mxu0
        %v947 = vadd.f32 0.0, %v946
        %v948 = vpop.f32.mrb[0].mxu0
        %v949 = vadd.f32 0.0, %v948
        %v950 = vpop.f32.mrb[0].mxu0
        %v951 = vadd.f32 0.0, %v950
        %v952 = vpop.f32.mrb[0].mxu0
        %v953 = vadd.f32 0.0, %v952
        %954 = vmatprep.mubr.bf16.mxu0 0
        %955 = vmatmul.mubr.bf16.gmra.mrb[0].mxu0 %v595
        %v956 = vpop.f32.mrb[0].mxu0
        %v957 = vadd.f32 0.0, %v956
        %v958 = vpop.f32.mrb[0].mxu0
        %v959 = vadd.f32 0.0, %v958
        %v960 = vpop.f32.mrb[0].mxu0
        %v961 = vadd.f32 0.0, %v960
        %v962 = vpop.f32.mrb[0].mxu0
        %v963 = vadd.f32 0.0, %v962
        %964 = vmatprep.mubr.bf16.mxu0 0
        %965 = vmatmul.mubr.bf16.gmra.mrb[0].mxu0 %v596
        %v966 = vpop.f32.mrb[0].mxu0
        %v967 = vadd.f32 0.0, %v966
        %v968 = vpop.f32.mrb[0].mxu0
        %v969 = vadd.f32 0.0, %v968
        %v970 = vpop.f32.mrb[0].mxu0
        %v971 = vadd.f32 0.0, %v970
        %v972 = vpop.f32.mrb[0].mxu0
        %v973 = vadd.f32 0.0, %v972
        %974 = vmatprep.mubr.bf16.mxu0 0
        %975 = vmatmul.mubr.bf16.gmra.mrb[0].mxu0 %v597
        %v976 = vpop.f32.mrb[0].mxu0
        %v977 = vadd.f32 0.0, %v976
        %v978 = vpop.f32.mrb[0].mxu0
        %v979 = vadd.f32 0.0, %v978
        %v980 = vpop.f32.mrb[0].mxu0
        %v981 = vadd.f32 0.0, %v980
        %v982 = vpop.f32.mrb[0].mxu0
        %v983 = vadd.f32 0.0, %v982
        %984 = vmatprep.mubr.bf16.mxu0 0
        %985 = vmatmul.mubr.bf16.gmra.mrb[0].mxu0 %v598
        %v986 = vpop.f32.mrb[0].mxu0
        %v987 = vadd.f32 0.0, %v986
        %v988 = vpop.f32.mrb[0].mxu0
        %v989 = vadd.f32 0.0, %v988
        %v990 = vpop.f32.mrb[0].mxu0
        %v991 = vadd.f32 0.0, %v990
        %v992 = vpop.f32.mrb[0].mxu0
        %v993 = vadd.f32 0.0, %v992
        %994 = vmatprep.mubr.bf16.mxu0 0
        %995 = vmatmul.mubr.bf16.gmra.mrb[0].mxu0 %v599
        %v996 = vpop.f32.mrb[0].mxu0
        %v997 = vadd.f32 0.0, %v996
        %v998 = vpop.f32.mrb[0].mxu0
        %v999 = vadd.f32 0.0, %v998
        %v1000 = vpop.f32.mrb[0].mxu0
        %v1001 = vadd.f32 0.0, %v1000
        %v1002 = vpop.f32.mrb[0].mxu0
        %v1003 = vadd.f32 0.0, %v1002
        %1004 = vmatprep.mubr.bf16.mxu0 0
        %1005 = vmatmul.mubr.bf16.gmra.mrb[0].mxu0 %v600
        %v1006 = vpop.f32.mrb[0].mxu0
        %v1007 = vadd.f32 0.0, %v1006
        %v1008 = vpop.f32.mrb[0].mxu0
        %v1009 = vadd.f32 0.0, %v1008
        %v1010 = vpop.f32.mrb[0].mxu0
        %v1011 = vadd.f32 0.0, %v1010
        %v1012 = vpop.f32.mrb[0].mxu0
        %v1013 = vadd.f32 0.0, %v1012
        %1014 = vmatprep.mubr.bf16.mxu0 0
        %1015 = vmatmul.mubr.bf16.gmra.mrb[0].mxu0 %v601
        %v1016 = vpop.f32.mrb[0].mxu0
        %v1017 = vadd.f32 0.0, %v1016
        %v1018 = vpop.f32.mrb[0].mxu0
        %v1019 = vadd.f32 0.0, %v1018
        %v1020 = vpop.f32.mrb[0].mxu0
        %v1021 = vadd.f32 0.0, %v1020
        %v1022 = vpop.f32.mrb[0].mxu0
        %v1023 = vadd.f32 0.0, %v1022
        %1024 = vmatprep.mubr.bf16.mxu0 0
        %1025 = vmatmul.mubr.bf16.gmra.mrb[0].mxu0 %v602
        %v1026 = vpop.f32.mrb[0].mxu0
        %v1027 = vadd.f32 0.0, %v1026
        %v1028 = vpop.f32.mrb[0].mxu0
        %v1029 = vadd.f32 0.0, %v1028
        %v1030 = vpop.f32.mrb[0].mxu0
        %v1031 = vadd.f32 0.0, %v1030
        %v1032 = vpop.f32.mrb[0].mxu0
        %v1033 = vadd.f32 0.0, %v1032
        %1034 = vmatprep.mubr.bf16.mxu0 0
        %1035 = vmatmul.mubr.bf16.gmra.mrb[0].mxu0 %v603
        %v1036 = vpop.f32.mrb[0].mxu0
        %v1037 = vadd.f32 0.0, %v1036
        %v1038 = vpop.f32.mrb[0].mxu0
        %v1039 = vadd.f32 0.0, %v1038
        %v1040 = vpop.f32.mrb[0].mxu0
        %v1041 = vadd.f32 0.0, %v1040
        %v1042 = vpop.f32.mrb[0].mxu0
        %v1043 = vadd.f32 0.0, %v1042
        %1044 = vdwg.mxu0
        %v1045 = vmax.f32 %v887, %v897
        %v1046 = vmax.f32 %v891, %v901
        %v1047 = vmax.f32 %v1045, %v907
        %v1048 = vmax.f32 %v1046, %v911
        %v1049 = vmax.f32 %v1047, %v917
        %v1050 = vmax.f32 %v1048, %v921
        %v1051 = vmax.f32 %v1049, %v927
        %v1052 = vmax.f32 %v1050, %v931
        %v1053 = vmax.f32 %v1051, %v937
        %v1054 = vmax.f32 %v1052, %v941
        %v1055 = vmax.f32 %v1053, %v947
        %v1056 = vmax.f32 %v1054, %v951
        %v1057 = vmax.f32 %v1055, %v957
        %v1058 = vmax.f32 %v1056, %v961
        %v1059 = vmax.f32 %v1057, %v967
        %v1060 = vmax.f32 %v1058, %v971
        %v1061 = vmax.f32 %v1059, %v977
        %v1062 = vmax.f32 %v1060, %v981
        %v1063 = vmax.f32 %v1061, %v987
        %v1064 = vmax.f32 %v1062, %v991
        %v1065 = vmax.f32 %v1063, %v997
        %v1066 = vmax.f32 %v1064, %v1001
        %v1067 = vmax.f32 %v1065, %v1007
        %v1068 = vmax.f32 %v1066, %v1011
        %v1069 = vmax.f32 %v1067, %v1017
        %v1070 = vmax.f32 %v1068, %v1021
        %v1071 = vmax.f32 %v1069, %v1027
        %v1072 = vmax.f32 %v1070, %v1031
        %v1073 = vmax.f32 %v1071, %v1037
        %v1074 = vmax.f32 %v1072, %v1041
        %v1075 = vmax.f32 %v1073, %v1074
        %v1076 = vrot.slane %v1075, 4
        %v1077 = vmax.f32 %v1075, %v1076
        %v1078 = vrot.slane %v1077, 2
        %v1079 = vmax.f32 %v1077, %v1078
        %v1080 = vrot.slane %v1079, 1
        %v1081 = vmax.f32 %v1079, %v1080
        %v1082 = vmax.f32 %v889, %v899
        %v1083 = vmax.f32 %v893, %v903
        %v1084 = vmax.f32 %v1082, %v909
        %v1085 = vmax.f32 %v1083, %v913
        %v1086 = vmax.f32 %v1084, %v919
        %v1087 = vmax.f32 %v1085, %v923
        %v1088 = vmax.f32 %v1086, %v929
        %v1089 = vmax.f32 %v1087, %v933
        %v1090 = vmax.f32 %v1088, %v939
        %v1091 = vmax.f32 %v1089, %v943
        %v1092 = vmax.f32 %v1090, %v949
        %v1093 = vmax.f32 %v1091, %v953
        %v1094 = vmax.f32 %v1092, %v959
        %v1095 = vmax.f32 %v1093, %v963
        %v1096 = vmax.f32 %v1094, %v969
        %v1097 = vmax.f32 %v1095, %v973
        %v1098 = vmax.f32 %v1096, %v979
        %v1099 = vmax.f32 %v1097, %v983
        %v1100 = vmax.f32 %v1098, %v989
        %v1101 = vmax.f32 %v1099, %v993
        %v1102 = vmax.f32 %v1100, %v999
        %v1103 = vmax.f32 %v1101, %v1003
        %v1104 = vmax.f32 %v1102, %v1009
        %v1105 = vmax.f32 %v1103, %v1013
        %v1106 = vmax.f32 %v1104, %v1019
        %v1107 = vmax.f32 %v1105, %v1023
        %v1108 = vmax.f32 %v1106, %v1029
        %v1109 = vmax.f32 %v1107, %v1033
        %v1110 = vmax.f32 %v1108, %v1039
        %v1111 = vmax.f32 %v1109, %v1043
        %v1112 = vmax.f32 %v1110, %v1111
        %v1113 = vrot.slane %v1112, 4
        %v1114 = vmax.f32 %v1112, %v1113
        %v1115 = vrot.slane %v1114, 2
        %v1116 = vmax.f32 %v1114, %v1115
        %v1117 = vrot.slane %v1116, 1
        %v1118 = vmax.f32 %v1116, %v1117
        %v1119 = vsub.f32 %v887, %v1081
        %v1120 = vsub.f32 %v889, %v1118
        %v1121 = vsub.f32 %v891, %v1081
        %v1122 = vsub.f32 %v893, %v1118
        %v1123 = vsub.f32 %v897, %v1081
        %v1124 = vsub.f32 %v899, %v1118
        %v1125 = vsub.f32 %v901, %v1081
        %v1126 = vsub.f32 %v903, %v1118
        %v1127 = vsub.f32 %v907, %v1081
        %v1128 = vsub.f32 %v909, %v1118
        %v1129 = vsub.f32 %v911, %v1081
        %v1130 = vsub.f32 %v913, %v1118
        %v1131 = vsub.f32 %v917, %v1081
        %v1132 = vsub.f32 %v919, %v1118
        %v1133 = vsub.f32 %v921, %v1081
        %v1134 = vsub.f32 %v923, %v1118
        %v1135 = vsub.f32 %v927, %v1081
        %v1136 = vsub.f32 %v929, %v1118
        %v1137 = vsub.f32 %v931, %v1081
        %v1138 = vsub.f32 %v933, %v1118
        %v1139 = vsub.f32 %v937, %v1081
        %v1140 = vsub.f32 %v939, %v1118
        %v1141 = vsub.f32 %v941, %v1081
        %v1142 = vsub.f32 %v943, %v1118
        %v1143 = vsub.f32 %v947, %v1081
        %v1144 = vsub.f32 %v949, %v1118
        %v1145 = vsub.f32 %v951, %v1081
        %v1146 = vsub.f32 %v953, %v1118
        %v1147 = vsub.f32 %v957, %v1081
        %v1148 = vsub.f32 %v959, %v1118
        %v1149 = vsub.f32 %v961, %v1081
        %v1150 = vsub.f32 %v963, %v1118
        %v1151 = vsub.f32 %v967, %v1081
        %v1152 = vsub.f32 %v969, %v1118
        %v1153 = vsub.f32 %v971, %v1081
        %v1154 = vsub.f32 %v973, %v1118
        %v1155 = vsub.f32 %v977, %v1081
        %v1156 = vsub.f32 %v979, %v1118
        %v1157 = vsub.f32 %v981, %v1081
        %v1158 = vsub.f32 %v983, %v1118
        %v1159 = vsub.f32 %v987, %v1081
        %v1160 = vsub.f32 %v989, %v1118
        %v1161 = vsub.f32 %v991, %v1081
        %v1162 = vsub.f32 %v993, %v1118
        %v1163 = vsub.f32 %v997, %v1081
        %v1164 = vsub.f32 %v999, %v1118
        %v1165 = vsub.f32 %v1001, %v1081
        %v1166 = vsub.f32 %v1003, %v1118
        %v1167 = vsub.f32 %v1007, %v1081
        %v1168 = vsub.f32 %v1009, %v1118
        %v1169 = vsub.f32 %v1011, %v1081
        %v1170 = vsub.f32 %v1013, %v1118
        %v1171 = vsub.f32 %v1017, %v1081
        %v1172 = vsub.f32 %v1019, %v1118
        %v1173 = vsub.f32 %v1021, %v1081
        %v1174 = vsub.f32 %v1023, %v1118
        %v1175 = vsub.f32 %v1027, %v1081
        %v1176 = vsub.f32 %v1029, %v1118
        %v1177 = vsub.f32 %v1031, %v1081
        %v1178 = vsub.f32 %v1033, %v1118
        %v1179 = vsub.f32 %v1037, %v1081
        %v1180 = vsub.f32 %v1039, %v1118
        %v1181 = vsub.f32 %v1041, %v1081
        %v1182 = vsub.f32 %v1043, %v1118
        %v1183 = vmul.f32 %v1119, 1.442695
        %v1184 = vpow.pop %v1183
        %v1185 = vmul.f32 %v1120, 1.442695
        %v1186 = vpow.pop %v1185
        %v1187 = vmul.f32 %v1121, 1.442695
        %v1188 = vpow.pop %v1187
        %v1189 = vmul.f32 %v1122, 1.442695
        %v1190 = vpow.pop %v1189
        %v1191 = vmul.f32 %v1123, 1.442695
        %v1192 = vpow.pop %v1191
        %v1193 = vmul.f32 %v1124, 1.442695
        %v1194 = vpow.pop %v1193
        %v1195 = vmul.f32 %v1125, 1.442695
        %v1196 = vpow.pop %v1195
        %v1197 = vmul.f32 %v1126, 1.442695
        %v1198 = vpow.pop %v1197
        %v1199 = vmul.f32 %v1127, 1.442695
        %v1200 = vpow.pop %v1199
        %v1201 = vmul.f32 %v1128, 1.442695
        %v1202 = vpow.pop %v1201
        %v1203 = vmul.f32 %v1129, 1.442695
        %v1204 = vpow.pop %v1203
        %v1205 = vmul.f32 %v1130, 1.442695
        %v1206 = vpow.pop %v1205
        %v1207 = vmul.f32 %v1131, 1.442695
        %v1208 = vpow.pop %v1207
        %v1209 = vmul.f32 %v1132, 1.442695
        %v1210 = vpow.pop %v1209
        %v1211 = vmul.f32 %v1133, 1.442695
        %v1212 = vpow.pop %v1211
        %v1213 = vmul.f32 %v1134, 1.442695
        %v1214 = vpow.pop %v1213
        %v1215 = vmul.f32 %v1135, 1.442695
        %v1216 = vpow.pop %v1215
        %v1217 = vmul.f32 %v1136, 1.442695
        %v1218 = vpow.pop %v1217
        %v1219 = vmul.f32 %v1137, 1.442695
        %v1220 = vpow.pop %v1219
        %v1221 = vmul.f32 %v1138, 1.442695
        %v1222 = vpow.pop %v1221
        %v1223 = vmul.f32 %v1139, 1.442695
        %v1224 = vpow.pop %v1223
        %v1225 = vmul.f32 %v1140, 1.442695
        %v1226 = vpow.pop %v1225
        %v1227 = vmul.f32 %v1141, 1.442695
        %v1228 = vpow.pop %v1227
        %v1229 = vmul.f32 %v1142, 1.442695
        %v1230 = vpow.pop %v1229
        %v1231 = vmul.f32 %v1143, 1.442695
        %v1232 = vpow.pop %v1231
        %v1233 = vmul.f32 %v1144, 1.442695
        %v1234 = vpow.pop %v1233
        %v1235 = vmul.f32 %v1145, 1.442695
        %v1236 = vpow.pop %v1235
        %v1237 = vmul.f32 %v1146, 1.442695
        %v1238 = vpow.pop %v1237
        %v1239 = vmul.f32 %v1147, 1.442695
        %v1240 = vpow.pop %v1239
        %v1241 = vmul.f32 %v1148, 1.442695
        %v1242 = vpow.pop %v1241
        %v1243 = vmul.f32 %v1149, 1.442695
        %v1244 = vpow.pop %v1243
        %v1245 = vmul.f32 %v1150, 1.442695
        %v1246 = vpow.pop %v1245
        %v1247 = vmul.f32 %v1151, 1.442695
        %v1248 = vpow.pop %v1247
        %v1249 = vmul.f32 %v1152, 1.442695
        %v1250 = vpow.pop %v1249
        %v1251 = vmul.f32 %v1153, 1.442695
        %v1252 = vpow.pop %v1251
        %v1253 = vmul.f32 %v1154, 1.442695
        %v1254 = vpow.pop %v1253
        %v1255 = vmul.f32 %v1155, 1.442695
        %v1256 = vpow.pop %v1255
        %v1257 = vmul.f32 %v1156, 1.442695
        %v1258 = vpow.pop %v1257
        %v1259 = vmul.f32 %v1157, 1.442695
        %v1260 = vpow.pop %v1259
        %v1261 = vmul.f32 %v1158, 1.442695
        %v1262 = vpow.pop %v1261
        %v1263 = vmul.f32 %v1159, 1.442695
        %v1264 = vpow.pop %v1263
        %v1265 = vmul.f32 %v1160, 1.442695
        %v1266 = vpow.pop %v1265
        %v1267 = vmul.f32 %v1161, 1.442695
        %v1268 = vpow.pop %v1267
        %v1269 = vmul.f32 %v1162, 1.442695
        %v1270 = vpow.pop %v1269
        %v1271 = vmul.f32 %v1163, 1.442695
        %v1272 = vpow.pop %v1271
        %v1273 = vmul.f32 %v1164, 1.442695
        %v1274 = vpow.pop %v1273
        %v1275 = vmul.f32 %v1165, 1.442695
        %v1276 = vpow.pop %v1275
        %v1277 = vmul.f32 %v1166, 1.442695
        %v1278 = vpow.pop %v1277
        %v1279 = vmul.f32 %v1167, 1.442695
        %v1280 = vpow.pop %v1279
        %v1281 = vmul.f32 %v1168, 1.442695
        %v1282 = vpow.pop %v1281
        %v1283 = vmul.f32 %v1169, 1.442695
        %v1284 = vpow.pop %v1283
        %v1285 = vmul.f32 %v1170, 1.442695
        %v1286 = vpow.pop %v1285
        %v1287 = vmul.f32 %v1171, 1.442695
        %v1288 = vpow.pop %v1287
        %v1289 = vmul.f32 %v1172, 1.442695
        %v1290 = vpow.pop %v1289
        %v1291 = vmul.f32 %v1173, 1.442695
        %v1292 = vpow.pop %v1291
        %v1293 = vmul.f32 %v1174, 1.442695
        %v1294 = vpow.pop %v1293
        %v1295 = vmul.f32 %v1175, 1.442695
        %v1296 = vpow.pop %v1295
        %v1297 = vmul.f32 %v1176, 1.442695
        %v1298 = vpow.pop %v1297
        %v1299 = vmul.f32 %v1177, 1.442695
        %v1300 = vpow.pop %v1299
        %v1301 = vmul.f32 %v1178, 1.442695
        %v1302 = vpow.pop %v1301
        %v1303 = vmul.f32 %v1179, 1.442695
        %v1304 = vpow.pop %v1303
        %v1305 = vmul.f32 %v1180, 1.442695
        %v1306 = vpow.pop %v1305
        %v1307 = vmul.f32 %v1181, 1.442695
        %v1308 = vpow.pop %v1307
        %v1309 = vmul.f32 %v1182, 1.442695
        %v1310 = vpow.pop %v1309
        %v1311 = vadd.f32 %v1184, %v1188
        %v1312 = vadd.f32 %v1311, %v1192
        %v1313 = vadd.f32 %v1312, %v1196
        %v1314 = vadd.f32 %v1313, %v1200
        %v1315 = vadd.f32 %v1314, %v1204
        %v1316 = vadd.f32 %v1315, %v1208
        %v1317 = vadd.f32 %v1316, %v1212
        %v1318 = vadd.f32 %v1317, %v1216
        %v1319 = vadd.f32 %v1318, %v1220
        %v1320 = vadd.f32 %v1319, %v1224
        %v1321 = vadd.f32 %v1320, %v1228
        %v1322 = vadd.f32 %v1321, %v1232
        %v1323 = vadd.f32 %v1322, %v1236
        %v1324 = vadd.f32 %v1323, %v1240
        %v1325 = vadd.f32 %v1324, %v1244
        %v1326 = vadd.f32 %v1325, %v1248
        %v1327 = vadd.f32 %v1326, %v1252
        %v1328 = vadd.f32 %v1327, %v1256
        %v1329 = vadd.f32 %v1328, %v1260
        %v1330 = vadd.f32 %v1329, %v1264
        %v1331 = vadd.f32 %v1330, %v1268
        %v1332 = vadd.f32 %v1331, %v1272
        %v1333 = vadd.f32 %v1332, %v1276
        %v1334 = vadd.f32 %v1333, %v1280
        %v1335 = vadd.f32 %v1334, %v1284
        %v1336 = vadd.f32 %v1335, %v1288
        %v1337 = vadd.f32 %v1336, %v1292
        %v1338 = vadd.f32 %v1337, %v1296
        %v1339 = vadd.f32 %v1338, %v1300
        %v1340 = vadd.f32 %v1339, %v1304
        %v1341 = vadd.f32 %v1340, %v1308
        %v1342 = vrot.slane %v1341, 4
        %v1343 = vadd.f32 %v1341, %v1342
        %v1344 = vrot.slane %v1343, 2
        %v1345 = vadd.f32 %v1343, %v1344
        %v1346 = vrot.slane %v1345, 1
        %v1347 = vadd.f32 %v1345, %v1346
        %v1348 = vadd.f32 %v1186, %v1190
        %v1349 = vadd.f32 %v1348, %v1194
        %v1350 = vadd.f32 %v1349, %v1198
        %v1351 = vadd.f32 %v1350, %v1202
        %v1352 = vadd.f32 %v1351, %v1206
        %v1353 = vadd.f32 %v1352, %v1210
        %v1354 = vadd.f32 %v1353, %v1214
        %v1355 = vadd.f32 %v1354, %v1218
        %v1356 = vadd.f32 %v1355, %v1222
        %v1357 = vadd.f32 %v1356, %v1226
        %v1358 = vadd.f32 %v1357, %v1230
        %v1359 = vadd.f32 %v1358, %v1234
        %v1360 = vadd.f32 %v1359, %v1238
        %v1361 = vadd.f32 %v1360, %v1242
        %v1362 = vadd.f32 %v1361, %v1246
        %v1363 = vadd.f32 %v1362, %v1250
        %v1364 = vadd.f32 %v1363, %v1254
        %v1365 = vadd.f32 %v1364, %v1258
        %v1366 = vadd.f32 %v1365, %v1262
        %v1367 = vadd.f32 %v1366, %v1266
        %v1368 = vadd.f32 %v1367, %v1270
        %v1369 = vadd.f32 %v1368, %v1274
        %v1370 = vadd.f32 %v1369, %v1278
        %v1371 = vadd.f32 %v1370, %v1282
        %v1372 = vadd.f32 %v1371, %v1286
        %v1373 = vadd.f32 %v1372, %v1290
        %v1374 = vadd.f32 %v1373, %v1294
        %v1375 = vadd.f32 %v1374, %v1298
        %v1376 = vadd.f32 %v1375, %v1302
        %v1377 = vadd.f32 %v1376, %v1306
        %v1378 = vadd.f32 %v1377, %v1310
        %v1379 = vrot.slane %v1378, 4
        %v1380 = vadd.f32 %v1378, %v1379
        %v1381 = vrot.slane %v1380, 2
        %v1382 = vadd.f32 %v1380, %v1381
        %v1383 = vrot.slane %v1382, 1
        %v1384 = vadd.f32 %v1382, %v1383
        %v1385 = vrcp.pop %v1347
        %v1386 = vrcp.pop %v1384
        %v1387 = vmul.f32 %v1184, %v1385
        %v1388 = vmul.f32 %v1186, %v1386
        %v1389 = vmul.f32 %v1188, %v1385
        %v1390 = vmul.f32 %v1190, %v1386
        %v1391 = vmul.f32 %v1192, %v1385
        %v1392 = vmul.f32 %v1194, %v1386
        %v1393 = vmul.f32 %v1196, %v1385
        %v1394 = vmul.f32 %v1198, %v1386
        %v1395 = vmul.f32 %v1200, %v1385
        %v1396 = vmul.f32 %v1202, %v1386
        %v1397 = vmul.f32 %v1204, %v1385
        %v1398 = vmul.f32 %v1206, %v1386
        %v1399 = vmul.f32 %v1208, %v1385
        %v1400 = vmul.f32 %v1210, %v1386
        %v1401 = vmul.f32 %v1212, %v1385
        %v1402 = vmul.f32 %v1214, %v1386
        %v1403 = vmul.f32 %v1216, %v1385
        %v1404 = vmul.f32 %v1218, %v1386
        %v1405 = vmul.f32 %v1220, %v1385
        %v1406 = vmul.f32 %v1222, %v1386
        %v1407 = vmul.f32 %v1224, %v1385
        %v1408 = vmul.f32 %v1226, %v1386
        %v1409 = vmul.f32 %v1228, %v1385
        %v1410 = vmul.f32 %v1230, %v1386
        %v1411 = vmul.f32 %v1232, %v1385
        %v1412 = vmul.f32 %v1234, %v1386
        %v1413 = vmul.f32 %v1236, %v1385
        %v1414 = vmul.f32 %v1238, %v1386
        %v1415 = vmul.f32 %v1240, %v1385
        %v1416 = vmul.f32 %v1242, %v1386
        %v1417 = vmul.f32 %v1244, %v1385
        %v1418 = vmul.f32 %v1246, %v1386
        %v1419 = vmul.f32 %v1248, %v1385
        %v1420 = vmul.f32 %v1250, %v1386
        %v1421 = vmul.f32 %v1252, %v1385
        %v1422 = vmul.f32 %v1254, %v1386
        %v1423 = vmul.f32 %v1256, %v1385
        %v1424 = vmul.f32 %v1258, %v1386
        %v1425 = vmul.f32 %v1260, %v1385
        %v1426 = vmul.f32 %v1262, %v1386
        %v1427 = vmul.f32 %v1264, %v1385
        %v1428 = vmul.f32 %v1266, %v1386
        %v1429 = vmul.f32 %v1268, %v1385
        %v1430 = vmul.f32 %v1270, %v1386
        %v1431 = vmul.f32 %v1272, %v1385
        %v1432 = vmul.f32 %v1274, %v1386
        %v1433 = vmul.f32 %v1276, %v1385
        %v1434 = vmul.f32 %v1278, %v1386
        %v1435 = vmul.f32 %v1280, %v1385
        %v1436 = vmul.f32 %v1282, %v1386
        %v1437 = vmul.f32 %v1284, %v1385
        %v1438 = vmul.f32 %v1286, %v1386
        %v1439 = vmul.f32 %v1288, %v1385
        %v1440 = vmul.f32 %v1290, %v1386
        %v1441 = vmul.f32 %v1292, %v1385
        %v1442 = vmul.f32 %v1294, %v1386
        %v1443 = vmul.f32 %v1296, %v1385
        %v1444 = vmul.f32 %v1298, %v1386
        %v1445 = vmul.f32 %v1300, %v1385
        %v1446 = vmul.f32 %v1302, %v1386
        %v1447 = vmul.f32 %v1304, %v1385
        %v1448 = vmul.f32 %v1306, %v1386
        %v1449 = vmul.f32 %v1308, %v1385
        %v1450 = vmul.f32 %v1310, %v1386
        %v1451 = vpack.c.bf16 %v1389, %v1387
        %v1452 = vpack.c.bf16 %v1390, %v1388
        %v1453 = vpack.c.bf16 %v1393, %v1391
        %v1454 = vpack.c.bf16 %v1394, %v1392
        %v1455 = vpack.c.bf16 %v1397, %v1395
        %v1456 = vpack.c.bf16 %v1398, %v1396
        %v1457 = vpack.c.bf16 %v1401, %v1399
        %v1458 = vpack.c.bf16 %v1402, %v1400
        %v1459 = vpack.c.bf16 %v1405, %v1403
        %v1460 = vpack.c.bf16 %v1406, %v1404
        %v1461 = vpack.c.bf16 %v1409, %v1407
        %v1462 = vpack.c.bf16 %v1410, %v1408
        %v1463 = vpack.c.bf16 %v1413, %v1411
        %v1464 = vpack.c.bf16 %v1414, %v1412
        %v1465 = vpack.c.bf16 %v1417, %v1415
        %v1466 = vpack.c.bf16 %v1418, %v1416
        %v1467 = vpack.c.bf16 %v1421, %v1419
        %v1468 = vpack.c.bf16 %v1422, %v1420
        %v1469 = vpack.c.bf16 %v1425, %v1423
        %v1470 = vpack.c.bf16 %v1426, %v1424
        %v1471 = vpack.c.bf16 %v1429, %v1427
        %v1472 = vpack.c.bf16 %v1430, %v1428
        %v1473 = vpack.c.bf16 %v1433, %v1431
        %v1474 = vpack.c.bf16 %v1434, %v1432
        %v1475 = vpack.c.bf16 %v1437, %v1435
        %v1476 = vpack.c.bf16 %v1438, %v1436
        %v1477 = vpack.c.bf16 %v1441, %v1439
        %v1478 = vpack.c.bf16 %v1442, %v1440
        %v1479 = vpack.c.bf16 %v1445, %v1443
        %v1480 = vpack.c.bf16 %v1446, %v1444
        %v1481 = vpack.c.bf16 %v1449, %v1447
        %v1482 = vpack.c.bf16 %v1450, %v1448
        %1483 = vmatprep.subr.bf16.mxu0 0
        %1484 = vmatpush1.bf16.msra.mxu0 %v836
        %1485 = vmatprep.subr.bf16.mxu0 0
        %1486 = vmatpush1.bf16.msra.mxu0 %v837
        %1487 = vmatprep.subr.bf16.mxu0 0
        %1488 = vmatpush1.bf16.msra.mxu0 %v838
        %1489 = vmatprep.subr.bf16.mxu0 0
        %1490 = vmatpush1.bf16.msra.mxu0 %v839
        %1491 = vmatprep.subr.bf16.mxu0 0
        %1492 = vmatpush1.bf16.msra.mxu0 %v840
        %1493 = vmatprep.subr.bf16.mxu0 0
        %1494 = vmatpush1.bf16.msra.mxu0 %v841
        %1495 = vmatprep.subr.bf16.mxu0 0
        %1496 = vmatpush1.bf16.msra.mxu0 %v842
        %1497 = vmatprep.subr.bf16.mxu0 0
        %1498 = vmatpush1.bf16.msra.mxu0 %v843
        %1499 = vmatprep.subr.bf16.mxu0 0
        %1500 = vmatpush1.bf16.msra.mxu0 %v844
        %1501 = vmatprep.subr.bf16.mxu0 0
        %1502 = vmatpush1.bf16.msra.mxu0 %v845
        %1503 = vmatprep.subr.bf16.mxu0 0
        %1504 = vmatpush1.bf16.msra.mxu0 %v846
        %1505 = vmatprep.subr.bf16.mxu0 0
        %1506 = vmatpush1.bf16.msra.mxu0 %v847
        %1507 = vmatprep.subr.bf16.mxu0 0
        %1508 = vmatpush1.bf16.msra.mxu0 %v848
        %1509 = vmatprep.subr.bf16.mxu0 0
        %1510 = vmatpush1.bf16.msra.mxu0 %v849
        %1511 = vmatprep.subr.bf16.mxu0 0
        %1512 = vmatpush1.bf16.msra.mxu0 %v850
        %1513 = vmatprep.subr.bf16.mxu0 0
        %1514 = vmatpush1.bf16.msra.mxu0 %v851
        %1515 = vmatprep.mubr.bf16.mxu0 %v1452
        %1516 = vmatmul.mubr.bf16.gmra.mrb[0].mxu0 %v1451
        %v1517 = vpop.f32.mrb[0].mxu0
        %v1518 = vadd.f32 0.0, %v1517
        %v1519 = vpop.f32.mrb[0].mxu0
        %v1520 = vpop.f32.mrb[0].mxu0
        %v1521 = vadd.f32 0.0, %v1520
        %v1522 = vpop.f32.mrb[0].mxu0
        %1523 = vmatprep.mubr.bf16.mxu0 %v1454
        %1524 = vmatmul.mubr.bf16.gmra.mrb[0].mxu0 %v1453
        %v1525 = vpop.f32.mrb[0].mxu0
        %v1526 = vadd.f32 0.0, %v1525
        %v1527 = vpop.f32.mrb[0].mxu0
        %v1528 = vpop.f32.mrb[0].mxu0
        %v1529 = vadd.f32 0.0, %v1528
        %v1530 = vpop.f32.mrb[0].mxu0
        %1531 = vmatprep.mubr.bf16.mxu0 %v1456
        %1532 = vmatmul.mubr.bf16.gmra.mrb[0].mxu0 %v1455
        %v1533 = vpop.f32.mrb[0].mxu0
        %v1534 = vadd.f32 0.0, %v1533
        %v1535 = vpop.f32.mrb[0].mxu0
        %v1536 = vpop.f32.mrb[0].mxu0
        %v1537 = vadd.f32 0.0, %v1536
        %v1538 = vpop.f32.mrb[0].mxu0
        %1539 = vmatprep.mubr.bf16.mxu0 %v1458
        %1540 = vmatmul.mubr.bf16.gmra.mrb[0].mxu0 %v1457
        %v1541 = vpop.f32.mrb[0].mxu0
        %v1542 = vadd.f32 0.0, %v1541
        %v1543 = vpop.f32.mrb[0].mxu0
        %v1544 = vpop.f32.mrb[0].mxu0
        %v1545 = vadd.f32 0.0, %v1544
        %v1546 = vpop.f32.mrb[0].mxu0
        %1547 = vmatprep.mubr.bf16.mxu0 %v1460
        %1548 = vmatmul.mubr.bf16.gmra.mrb[0].mxu0 %v1459
        %v1549 = vpop.f32.mrb[0].mxu0
        %v1550 = vadd.f32 0.0, %v1549
        %v1551 = vpop.f32.mrb[0].mxu0
        %v1552 = vpop.f32.mrb[0].mxu0
        %v1553 = vadd.f32 0.0, %v1552
        %v1554 = vpop.f32.mrb[0].mxu0
        %1555 = vmatprep.mubr.bf16.mxu0 %v1462
        %1556 = vmatmul.mubr.bf16.gmra.mrb[0].mxu0 %v1461
        %v1557 = vpop.f32.mrb[0].mxu0
        %v1558 = vadd.f32 0.0, %v1557
        %v1559 = vpop.f32.mrb[0].mxu0
        %v1560 = vpop.f32.mrb[0].mxu0
        %v1561 = vadd.f32 0.0, %v1560
        %v1562 = vpop.f32.mrb[0].mxu0
        %1563 = vmatprep.mubr.bf16.mxu0 %v1464
        %1564 = vmatmul.mubr.bf16.gmra.mrb[0].mxu0 %v1463
        %v1565 = vpop.f32.mrb[0].mxu0
        %v1566 = vadd.f32 0.0, %v1565
        %v1567 = vpop.f32.mrb[0].mxu0
        %v1568 = vpop.f32.mrb[0].mxu0
        %v1569 = vadd.f32 0.0, %v1568
        %v1570 = vpop.f32.mrb[0].mxu0
        %1571 = vmatprep.mubr.bf16.mxu0 %v1466
        %1572 = vmatmul.mubr.bf16.gmra.mrb[0].mxu0 %v1465
        %v1573 = vpop.f32.mrb[0].mxu0
        %v1574 = vadd.f32 0.0, %v1573
        %v1575 = vpop.f32.mrb[0].mxu0
        %v1576 = vpop.f32.mrb[0].mxu0
        %v1577 = vadd.f32 0.0, %v1576
        %v1578 = vpop.f32.mrb[0].mxu0
        %1579 = vmatprep.mubr.bf16.mxu0 %v1468
        %1580 = vmatmul.mubr.bf16.gmra.mrb[0].mxu0 %v1467
        %v1581 = vpop.f32.mrb[0].mxu0
        %v1582 = vadd.f32 0.0, %v1581
        %v1583 = vpop.f32.mrb[0].mxu0
        %v1584 = vpop.f32.mrb[0].mxu0
        %v1585 = vadd.f32 0.0, %v1584
        %v1586 = vpop.f32.mrb[0].mxu0
        %1587 = vmatprep.mubr.bf16.mxu0 %v1470
        %1588 = vmatmul.mubr.bf16.gmra.mrb[0].mxu0 %v1469
        %v1589 = vpop.f32.mrb[0].mxu0
        %v1590 = vadd.f32 0.0, %v1589
        %v1591 = vpop.f32.mrb[0].mxu0
        %v1592 = vpop.f32.mrb[0].mxu0
        %v1593 = vadd.f32 0.0, %v1592
        %v1594 = vpop.f32.mrb[0].mxu0
        %1595 = vmatprep.mubr.bf16.mxu0 %v1472
        %1596 = vmatmul.mubr.bf16.gmra.mrb[0].mxu0 %v1471
        %v1597 = vpop.f32.mrb[0].mxu0
        %v1598 = vadd.f32 0.0, %v1597
        %v1599 = vpop.f32.mrb[0].mxu0
        %v1600 = vpop.f32.mrb[0].mxu0
        %v1601 = vadd.f32 0.0, %v1600
        %v1602 = vpop.f32.mrb[0].mxu0
        %1603 = vmatprep.mubr.bf16.mxu0 %v1474
        %1604 = vmatmul.mubr.bf16.gmra.mrb[0].mxu0 %v1473
        %v1605 = vpop.f32.mrb[0].mxu0
        %v1606 = vadd.f32 0.0, %v1605
        %v1607 = vpop.f32.mrb[0].mxu0
        %v1608 = vpop.f32.mrb[0].mxu0
        %v1609 = vadd.f32 0.0, %v1608
        %v1610 = vpop.f32.mrb[0].mxu0
        %1611 = vmatprep.mubr.bf16.mxu0 %v1476
        %1612 = vmatmul.mubr.bf16.gmra.mrb[0].mxu0 %v1475
        %v1613 = vpop.f32.mrb[0].mxu0
        %v1614 = vadd.f32 0.0, %v1613
        %v1615 = vpop.f32.mrb[0].mxu0
        %v1616 = vpop.f32.mrb[0].mxu0
        %v1617 = vadd.f32 0.0, %v1616
        %v1618 = vpop.f32.mrb[0].mxu0
        %1619 = vmatprep.mubr.bf16.mxu0 %v1478
        %1620 = vmatmul.mubr.bf16.gmra.mrb[0].mxu0 %v1477
        %v1621 = vpop.f32.mrb[0].mxu0
        %v1622 = vadd.f32 0.0, %v1621
        %v1623 = vpop.f32.mrb[0].mxu0
        %v1624 = vpop.f32.mrb[0].mxu0
        %v1625 = vadd.f32 0.0, %v1624
        %v1626 = vpop.f32.mrb[0].mxu0
        %1627 = vmatprep.mubr.bf16.mxu0 %v1480
        %1628 = vmatmul.mubr.bf16.gmra.mrb[0].mxu0 %v1479
        %v1629 = vpop.f32.mrb[0].mxu0
        %v1630 = vadd.f32 0.0, %v1629
        %v1631 = vpop.f32.mrb[0].mxu0
        %v1632 = vpop.f32.mrb[0].mxu0
        %v1633 = vadd.f32 0.0, %v1632
        %v1634 = vpop.f32.mrb[0].mxu0
        %1635 = vmatprep.mubr.bf16.mxu0 %v1482
        %1636 = vmatmul.mubr.bf16.gmra.mrb[0].mxu0 %v1481
        %v1637 = vpop.f32.mrb[0].mxu0
        %v1638 = vadd.f32 0.0, %v1637
        %v1639 = vpop.f32.mrb[0].mxu0
        %v1640 = vpop.f32.mrb[0].mxu0
        %v1641 = vadd.f32 0.0, %v1640
        %v1642 = vpop.f32.mrb[0].mxu0
        %1643 = vdwg.mxu0
        %v1644 = vsub.f32 %v315, %v1518
        %v1645 = vsub.f32 %v316, %v1521
        %v1646 = vsub.f32 %v317, %v1526
        %v1647 = vsub.f32 %v318, %v1529
        %v1648 = vsub.f32 %v319, %v1534
        %v1649 = vsub.f32 %v320, %v1537
        %v1650 = vsub.f32 %v321, %v1542
        %v1651 = vsub.f32 %v322, %v1545
        %v1652 = vsub.f32 %v323, %v1550
        %v1653 = vsub.f32 %v324, %v1553
        %v1654 = vsub.f32 %v325, %v1558
        %v1655 = vsub.f32 %v326, %v1561
        %v1656 = vsub.f32 %v327, %v1566
        %v1657 = vsub.f32 %v328, %v1569
        %v1658 = vsub.f32 %v329, %v1574
        %v1659 = vsub.f32 %v330, %v1577
        %v1660 = vsub.f32 %v331, %v1582
        %v1661 = vsub.f32 %v332, %v1585
        %v1662 = vsub.f32 %v333, %v1590
        %v1663 = vsub.f32 %v334, %v1593
        %v1664 = vsub.f32 %v335, %v1598
        %v1665 = vsub.f32 %v336, %v1601
        %v1666 = vsub.f32 %v337, %v1606
        %v1667 = vsub.f32 %v338, %v1609
        %v1668 = vsub.f32 %v339, %v1614
        %v1669 = vsub.f32 %v340, %v1617
        %v1670 = vsub.f32 %v341, %v1622
        %v1671 = vsub.f32 %v342, %v1625
        %v1672 = vsub.f32 %v343, %v1630
        %v1673 = vsub.f32 %v344, %v1633
        %v1674 = vsub.f32 %v345, %v1638
        %v1675 = vsub.f32 %v346, %v1641
        %v1676 = vpack.c.bf16 %v1645, %v1644
        %v1677 = vpack.c.bf16 %v1647, %v1646
        %v1678 = vpack.c.bf16 %v1649, %v1648
        %v1679 = vpack.c.bf16 %v1651, %v1650
        %v1680 = vpack.c.bf16 %v1653, %v1652
        %v1681 = vpack.c.bf16 %v1655, %v1654
        %v1682 = vpack.c.bf16 %v1657, %v1656
        %v1683 = vpack.c.bf16 %v1659, %v1658
        %v1684 = vpack.c.bf16 %v1661, %v1660
        %v1685 = vpack.c.bf16 %v1663, %v1662
        %v1686 = vpack.c.bf16 %v1665, %v1664
        %v1687 = vpack.c.bf16 %v1667, %v1666
        %v1688 = vpack.c.bf16 %v1669, %v1668
        %v1689 = vpack.c.bf16 %v1671, %v1670
        %v1690 = vpack.c.bf16 %v1673, %v1672
        %v1691 = vpack.c.bf16 %v1675, %v1674
        %v1692 = vld [vmem:[#allocation8] sm:$0xf]
        %v1693 = vld [vmem:[#allocation8 + $0x4] sm:$0xf]
        %v1694 = vld [vmem:[#allocation8 + $0x8] sm:$0xf]
        %v1695 = vld [vmem:[#allocation8 + $0xc] sm:$0xf]
        %v1696 = vld [vmem:[#allocation8 + $0x10] sm:$0xf]
        %v1697 = vld [vmem:[#allocation8 + $0x14] sm:$0xf]
        %v1698 = vld [vmem:[#allocation8 + $0x18] sm:$0xf]
        %v1699 = vld [vmem:[#allocation8 + $0x1c] sm:$0xf]
        %v1700 = vld [vmem:[#allocation8 + $0x20] sm:$0xf]
        %v1701 = vld [vmem:[#allocation8 + $0x24] sm:$0xf]
        %v1702 = vld [vmem:[#allocation8 + $0x28] sm:$0xf]
        %v1703 = vld [vmem:[#allocation8 + $0x2c] sm:$0xf]
        %v1704 = vld [vmem:[#allocation8 + $0x30] sm:$0xf]
        %v1705 = vld [vmem:[#allocation8 + $0x34] sm:$0xf]
        %v1706 = vld [vmem:[#allocation8 + $0x38] sm:$0xf]
        %v1707 = vld [vmem:[#allocation8 + $0x3c] sm:$0xf]
        %v1708 = vld [vmem:[%s5] sm:$0x1]
        %v1710 = vlaneseq
        %v1711 = vshrl.u32 %v1710, 7
        %v1712 = vsub.s32 0, %v1711
        %v1713 = vrot.slane %v1708, %v1712
        %v1731 = vunpack.c.l.b16 %v1692
        %v1732 = vunpack.c.l.b16 %v1693
        %v1733 = vunpack.c.l.b16 %v1694
        %v1734 = vunpack.c.l.b16 %v1695
        %v1735 = vunpack.c.l.b16 %v1696
        %v1736 = vunpack.c.l.b16 %v1697
        %v1737 = vunpack.c.l.b16 %v1698
        %v1738 = vunpack.c.l.b16 %v1699
        %v1739 = vunpack.c.l.b16 %v1700
        %v1740 = vunpack.c.l.b16 %v1701
        %v1741 = vunpack.c.l.b16 %v1702
        %v1742 = vunpack.c.l.b16 %v1703
        %v1743 = vunpack.c.l.b16 %v1704
        %v1744 = vunpack.c.l.b16 %v1705
        %v1745 = vunpack.c.l.b16 %v1706
        %v1746 = vunpack.c.l.b16 %v1707
        %v1747 = vpack.c.b16 %v1732, %v1731
        %v1748 = vpack.c.b16 %v1734, %v1733
        %v1749 = vpack.c.b16 %v1736, %v1735
        %v1750 = vpack.c.b16 %v1738, %v1737
        %v1751 = vpack.c.b16 %v1740, %v1739
        %v1752 = vpack.c.b16 %v1742, %v1741
        %v1753 = vpack.c.b16 %v1744, %v1743
        %v1754 = vpack.c.b16 %v1746, %v1745
        %1763 = vmatprep.subr.bf16.mxu0 0
        %1764 = vmatpush1.bf16.msra.mxu0 %v1747
        %1765 = vmatprep.subr.bf16.mxu0 0
        %1766 = vmatpush1.bf16.msra.mxu0 %v1748
        %1767 = vmatprep.subr.bf16.mxu0 0
        %1768 = vmatpush1.bf16.msra.mxu0 %v1749
        %1769 = vmatprep.subr.bf16.mxu0 0
        %1770 = vmatpush1.bf16.msra.mxu0 %v1750
        %1771 = vmatprep.subr.bf16.mxu0 0
        %1772 = vmatpush1.bf16.msra.mxu0 %v1751
        %1773 = vmatprep.subr.bf16.mxu0 0
        %1774 = vmatpush1.bf16.msra.mxu0 %v1752
        %1775 = vmatprep.subr.bf16.mxu0 0
        %1776 = vmatpush1.bf16.msra.mxu0 %v1753
        %1777 = vmatprep.subr.bf16.mxu0 0
        %1778 = vmatpush1.bf16.msra.mxu0 %v1754
        %1779 = vmatprep.subr.bf16.mxu0 0
        %1780 = vmatpush1.bf16.msra.mxu0 0
        %1781 = vmatprep.subr.bf16.mxu0 0
        %1782 = vmatpush1.bf16.msra.mxu0 0
        %1783 = vmatprep.subr.bf16.mxu0 0
        %1784 = vmatpush1.bf16.msra.mxu0 0
        %1785 = vmatprep.subr.bf16.mxu0 0
        %1786 = vmatpush1.bf16.msra.mxu0 0
        %1787 = vmatprep.subr.bf16.mxu0 0
        %1788 = vmatpush1.bf16.msra.mxu0 0
        %1789 = vmatprep.subr.bf16.mxu0 0
        %1790 = vmatpush1.bf16.msra.mxu0 0
        %1791 = vmatprep.subr.bf16.mxu0 0
        %1792 = vmatpush1.bf16.msra.mxu0 0
        %1793 = vmatprep.subr.bf16.mxu0 0
        %1794 = vmatpush1.bf16.msra.mxu0 0
        %1795 = vmatprep.mubr.bf16.mxu0 0
        %1796 = vmatmul.mubr.bf16.gmra.mrb[0].mxu0 %v1676
        %v1797 = vpop.f32.mrb[0].mxu0
        %v1798 = vadd.f32 %v1713, %v1797
        %v1799 = vpop.f32.mrb[0].mxu0
        %v1800 = vpop.f32.mrb[0].mxu0
        %v1801 = vadd.f32 %v1713, %v1800
        %v1802 = vpop.f32.mrb[0].mxu0
        %1803 = vmatprep.mubr.bf16.mxu0 0
        %1804 = vmatmul.mubr.bf16.gmra.mrb[0].mxu0 %v1677
        %v1805 = vpop.f32.mrb[0].mxu0
        %v1806 = vadd.f32 %v1713, %v1805
        %v1807 = vpop.f32.mrb[0].mxu0
        %v1808 = vpop.f32.mrb[0].mxu0
        %v1809 = vadd.f32 %v1713, %v1808
        %v1810 = vpop.f32.mrb[0].mxu0
        %1811 = vmatprep.mubr.bf16.mxu0 0
        %1812 = vmatmul.mubr.bf16.gmra.mrb[0].mxu0 %v1678
        %v1813 = vpop.f32.mrb[0].mxu0
        %v1814 = vadd.f32 %v1713, %v1813
        %v1815 = vpop.f32.mrb[0].mxu0
        %v1816 = vpop.f32.mrb[0].mxu0
        %v1817 = vadd.f32 %v1713, %v1816
        %v1818 = vpop.f32.mrb[0].mxu0
        %1819 = vmatprep.mubr.bf16.mxu0 0
        %1820 = vmatmul.mubr.bf16.gmra.mrb[0].mxu0 %v1679
        %v1821 = vpop.f32.mrb[0].mxu0
        %v1822 = vadd.f32 %v1713, %v1821
        %v1823 = vpop.f32.mrb[0].mxu0
        %v1824 = vpop.f32.mrb[0].mxu0
        %v1825 = vadd.f32 %v1713, %v1824
        %v1826 = vpop.f32.mrb[0].mxu0
        %1827 = vmatprep.mubr.bf16.mxu0 0
        %1828 = vmatmul.mubr.bf16.gmra.mrb[0].mxu0 %v1680
        %v1829 = vpop.f32.mrb[0].mxu0
        %v1830 = vadd.f32 %v1713, %v1829
        %v1831 = vpop.f32.mrb[0].mxu0
        %v1832 = vpop.f32.mrb[0].mxu0
        %v1833 = vadd.f32 %v1713, %v1832
        %v1834 = vpop.f32.mrb[0].mxu0
        %1835 = vmatprep.mubr.bf16.mxu0 0
        %1836 = vmatmul.mubr.bf16.gmra.mrb[0].mxu0 %v1681
        %v1837 = vpop.f32.mrb[0].mxu0
        %v1838 = vadd.f32 %v1713, %v1837
        %v1839 = vpop.f32.mrb[0].mxu0
        %v1840 = vpop.f32.mrb[0].mxu0
        %v1841 = vadd.f32 %v1713, %v1840
        %v1842 = vpop.f32.mrb[0].mxu0
        %1843 = vmatprep.mubr.bf16.mxu0 0
        %1844 = vmatmul.mubr.bf16.gmra.mrb[0].mxu0 %v1682
        %v1845 = vpop.f32.mrb[0].mxu0
        %v1846 = vadd.f32 %v1713, %v1845
        %v1847 = vpop.f32.mrb[0].mxu0
        %v1848 = vpop.f32.mrb[0].mxu0
        %v1849 = vadd.f32 %v1713, %v1848
        %v1850 = vpop.f32.mrb[0].mxu0
        %1851 = vmatprep.mubr.bf16.mxu0 0
        %1852 = vmatmul.mubr.bf16.gmra.mrb[0].mxu0 %v1683
        %v1853 = vpop.f32.mrb[0].mxu0
        %v1854 = vadd.f32 %v1713, %v1853
        %v1855 = vpop.f32.mrb[0].mxu0
        %v1856 = vpop.f32.mrb[0].mxu0
        %v1857 = vadd.f32 %v1713, %v1856
        %v1858 = vpop.f32.mrb[0].mxu0
        %1859 = vmatprep.mubr.bf16.mxu0 0
        %1860 = vmatmul.mubr.bf16.gmra.mrb[0].mxu0 %v1684
        %v1861 = vpop.f32.mrb[0].mxu0
        %v1862 = vadd.f32 %v1713, %v1861
        %v1863 = vpop.f32.mrb[0].mxu0
        %v1864 = vpop.f32.mrb[0].mxu0
        %v1865 = vadd.f32 %v1713, %v1864
        %v1866 = vpop.f32.mrb[0].mxu0
        %1867 = vmatprep.mubr.bf16.mxu0 0
        %1868 = vmatmul.mubr.bf16.gmra.mrb[0].mxu0 %v1685
        %v1869 = vpop.f32.mrb[0].mxu0
        %v1870 = vadd.f32 %v1713, %v1869
        %v1871 = vpop.f32.mrb[0].mxu0
        %v1872 = vpop.f32.mrb[0].mxu0
        %v1873 = vadd.f32 %v1713, %v1872
        %v1874 = vpop.f32.mrb[0].mxu0
        %1875 = vmatprep.mubr.bf16.mxu0 0
        %1876 = vmatmul.mubr.bf16.gmra.mrb[0].mxu0 %v1686
        %v1877 = vpop.f32.mrb[0].mxu0
        %v1878 = vadd.f32 %v1713, %v1877
        %v1879 = vpop.f32.mrb[0].mxu0
        %v1880 = vpop.f32.mrb[0].mxu0
        %v1881 = vadd.f32 %v1713, %v1880
        %v1882 = vpop.f32.mrb[0].mxu0
        %1883 = vmatprep.mubr.bf16.mxu0 0
        %1884 = vmatmul.mubr.bf16.gmra.mrb[0].mxu0 %v1687
        %v1885 = vpop.f32.mrb[0].mxu0
        %v1886 = vadd.f32 %v1713, %v1885
        %v1887 = vpop.f32.mrb[0].mxu0
        %v1888 = vpop.f32.mrb[0].mxu0
        %v1889 = vadd.f32 %v1713, %v1888
        %v1890 = vpop.f32.mrb[0].mxu0
        %1891 = vmatprep.mubr.bf16.mxu0 0
        %1892 = vmatmul.mubr.bf16.gmra.mrb[0].mxu0 %v1688
        %v1893 = vpop.f32.mrb[0].mxu0
        %v1894 = vadd.f32 %v1713, %v1893
        %v1895 = vpop.f32.mrb[0].mxu0
        %v1896 = vpop.f32.mrb[0].mxu0
        %v1897 = vadd.f32 %v1713, %v1896
        %v1898 = vpop.f32.mrb[0].mxu0
        %1899 = vmatprep.mubr.bf16.mxu0 0
        %1900 = vmatmul.mubr.bf16.gmra.mrb[0].mxu0 %v1689
        %v1901 = vpop.f32.mrb[0].mxu0
        %v1902 = vadd.f32 %v1713, %v1901
        %v1903 = vpop.f32.mrb[0].mxu0
        %v1904 = vpop.f32.mrb[0].mxu0
        %v1905 = vadd.f32 %v1713, %v1904
        %v1906 = vpop.f32.mrb[0].mxu0
        %1907 = vmatprep.mubr.bf16.mxu0 0
        %1908 = vmatmul.mubr.bf16.gmra.mrb[0].mxu0 %v1690
        %v1909 = vpop.f32.mrb[0].mxu0
        %v1910 = vadd.f32 %v1713, %v1909
        %v1911 = vpop.f32.mrb[0].mxu0
        %v1912 = vpop.f32.mrb[0].mxu0
        %v1913 = vadd.f32 %v1713, %v1912
        %v1914 = vpop.f32.mrb[0].mxu0
        %1915 = vmatprep.mubr.bf16.mxu0 0
        %1916 = vmatmul.mubr.bf16.gmra.mrb[0].mxu0 %v1691
        %v1917 = vpop.f32.mrb[0].mxu0
        %v1918 = vadd.f32 %v1713, %v1917
        %v1919 = vpop.f32.mrb[0].mxu0
        %v1920 = vpop.f32.mrb[0].mxu0
        %v1921 = vadd.f32 %v1713, %v1920
        %v1922 = vpop.f32.mrb[0].mxu0
        %1923 = vdwg.mxu0
        %v1924 = vmax.f32 %v1798, 0.0
        %v1925 = vmax.f32 %v1801, 0.0
        %v1926 = vmax.f32 %v1806, 0.0
        %v1927 = vmax.f32 %v1809, 0.0
        %v1928 = vmax.f32 %v1814, 0.0
        %v1929 = vmax.f32 %v1817, 0.0
        %v1930 = vmax.f32 %v1822, 0.0
        %v1931 = vmax.f32 %v1825, 0.0
        %v1932 = vmax.f32 %v1830, 0.0
        %v1933 = vmax.f32 %v1833, 0.0
        %v1934 = vmax.f32 %v1838, 0.0
        %v1935 = vmax.f32 %v1841, 0.0
        %v1936 = vmax.f32 %v1846, 0.0
        %v1937 = vmax.f32 %v1849, 0.0
        %v1938 = vmax.f32 %v1854, 0.0
        %v1939 = vmax.f32 %v1857, 0.0
        %v1940 = vmax.f32 %v1862, 0.0
        %v1941 = vmax.f32 %v1865, 0.0
        %v1942 = vmax.f32 %v1870, 0.0
        %v1943 = vmax.f32 %v1873, 0.0
        %v1944 = vmax.f32 %v1878, 0.0
        %v1945 = vmax.f32 %v1881, 0.0
        %v1946 = vmax.f32 %v1886, 0.0
        %v1947 = vmax.f32 %v1889, 0.0
        %v1948 = vmax.f32 %v1894, 0.0
        %v1949 = vmax.f32 %v1897, 0.0
        %v1950 = vmax.f32 %v1902, 0.0
        %v1951 = vmax.f32 %v1905, 0.0
        %v1952 = vmax.f32 %v1910, 0.0
        %v1953 = vmax.f32 %v1913, 0.0
        %v1954 = vmax.f32 %v1918, 0.0
        %v1955 = vmax.f32 %v1921, 0.0
        %v1956 = vadd.f32 %v315, %v1924
        %v1957 = vadd.f32 %v316, %v1925
        %v1958 = vadd.f32 %v317, %v1926
        %v1959 = vadd.f32 %v318, %v1927
        %v1960 = vadd.f32 %v319, %v1928
        %v1961 = vadd.f32 %v320, %v1929
        %v1962 = vadd.f32 %v321, %v1930
        %v1963 = vadd.f32 %v322, %v1931
        %v1964 = vadd.f32 %v323, %v1932
        %v1965 = vadd.f32 %v324, %v1933
        %v1966 = vadd.f32 %v325, %v1934
        %v1967 = vadd.f32 %v326, %v1935
        %v1968 = vadd.f32 %v327, %v1936
        %v1969 = vadd.f32 %v328, %v1937
        %v1970 = vadd.f32 %v329, %v1938
        %v1971 = vadd.f32 %v330, %v1939
        %v1972 = vadd.f32 %v331, %v1940
        %v1973 = vadd.f32 %v332, %v1941
        %v1974 = vadd.f32 %v333, %v1942
        %v1975 = vadd.f32 %v334, %v1943
        %v1976 = vadd.f32 %v335, %v1944
        %v1977 = vadd.f32 %v336, %v1945
        %v1978 = vadd.f32 %v337, %v1946
        %v1979 = vadd.f32 %v338, %v1947
        %v1980 = vadd.f32 %v339, %v1948
        %v1981 = vadd.f32 %v340, %v1949
        %v1982 = vadd.f32 %v341, %v1950
        %v1983 = vadd.f32 %v342, %v1951
        %v1984 = vadd.f32 %v343, %v1952
        %v1985 = vadd.f32 %v344, %v1953
        %v1986 = vadd.f32 %v345, %v1954
        %v1987 = vadd.f32 %v346, %v1955
        %1988 = vst [vmem:[%s313] sm:$0xff] %v1956
        %1989 = vst [vmem:[%s313 + $0x8] sm:$0xff] %v1957
        %1990 = vst [vmem:[%s313 + $0x10] sm:$0xff] %v1958
        %1991 = vst [vmem:[%s313 + $0x18] sm:$0xff] %v1959
        %1992 = vst [vmem:[%s313 + $0x20] sm:$0xff] %v1960
        %1993 = vst [vmem:[%s313 + $0x28] sm:$0xff] %v1961
        %1994 = vst [vmem:[%s313 + $0x30] sm:$0xff] %v1962
        %1995 = vst [vmem:[%s313 + $0x38] sm:$0xff] %v1963
        %1996 = vst [vmem:[%s313 + $0x40] sm:$0xff] %v1964
        %1997 = vst [vmem:[%s313 + $0x48] sm:$0xff] %v1965
        %1998 = vst [vmem:[%s313 + $0x50] sm:$0xff] %v1966
        %1999 = vst [vmem:[%s313 + $0x58] sm:$0xff] %v1967
        %2000 = vst [vmem:[%s313 + $0x60] sm:$0xff] %v1968
        %2001 = vst [vmem:[%s313 + $0x68] sm:$0xff] %v1969
        %2002 = vst [vmem:[%s313 + $0x70] sm:$0xff] %v1970
        %2003 = vst [vmem:[%s313 + $0x78] sm:$0xff] %v1971
        %2004 = vst [vmem:[%s313 + $0x80] sm:$0xff] %v1972
        %2005 = vst [vmem:[%s313 + $0x88] sm:$0xff] %v1973
        %2006 = vst [vmem:[%s313 + $0x90] sm:$0xff] %v1974
        %2007 = vst [vmem:[%s313 + $0x98] sm:$0xff] %v1975
        %2008 = vst [vmem:[%s313 + $0xa0] sm:$0xff] %v1976
        %2009 = vst [vmem:[%s313 + $0xa8] sm:$0xff] %v1977
        %2010 = vst [vmem:[%s313 + $0xb0] sm:$0xff] %v1978
        %2011 = vst [vmem:[%s313 + $0xb8] sm:$0xff] %v1979
        %2012 = vst [vmem:[%s313 + $0xc0] sm:$0xff] %v1980
        %2013 = vst [vmem:[%s313 + $0xc8] sm:$0xff] %v1981
        %2014 = vst [vmem:[%s313 + $0xd0] sm:$0xff] %v1982
        %2015 = vst [vmem:[%s313 + $0xd8] sm:$0xff] %v1983
        %2016 = vst [vmem:[%s313 + $0xe0] sm:$0xff] %v1984
        %2017 = vst [vmem:[%s313 + $0xe8] sm:$0xff] %v1985
        %2018 = vst [vmem:[%s313 + $0xf0] sm:$0xff] %v1986
        %2019 = vst [vmem:[%s313 + $0xf8] sm:$0xff] %v1987
        %s2020 = sand.u32 %s164, 1
        %s2021 = scalar_lea.sflag [#allocation4], %s2020
        %s2022 = sand.u32 %s164, 1
        %s2023 = smul.addr %s2022, 256
        %s2024 = scalar_lea.vmem [#allocation10], %s2023
        // Predicated region
        $region61: #{local_attention_forward.1} parent=43 // pred_check
          %p2025 = pneg %p174
        $region62: #{local_attention_forward.1} parent=43 // pred_check_branch
          %2027 = sbr.rel (%p2025) target = $region64
        $region63: #{local_attention_forward.1} parent=43 // pred_region
          %s2029 = ssub.s32 4096, 4096
          %2030 = vsyncadd %s2021, %s2029
          %s2031 = smul.addr %s25, 32
          %s2032 = smul.addr %s2031, 128
          %s2033 = scalar_lea.hbm %s6, %s2032
          %s2034 = sshll.u32 %s2024, 4
          %s2035 = int_to_ptr.vmem [resolvable:$true] %s2034
          %2040 = dma.vmem_to_hbm [thread:$0]  %s2035, 4096, %s2033, %s2021, 128, 128, 8
        $region64: #{local_attention_forward.1} parent=43 // pred_fallthru
          _
      $region44: #{local_attention_forward.1} parent=5 // pred_fallthru
        _
      %p2041 = scmp.le.s32.totalorder 2, %s20
      // Predicated region
      $region65: #{local_attention_forward.1} parent=5 // pred_check
        %p2042 = pneg %p2041
      $region66: #{local_attention_forward.1} parent=5 // pred_check_branch
        %2044 = sbr.rel (%p2042) target = $region68
      $region67: #{local_attention_forward.1} parent=5 // pred_region
        %s2045 = ssub.s32 %s20, 2
        // Predicated region
        $region69: #{local_attention_forward.1} parent=67 // pred_check
          %p2046 = pneg %p180
        $region70: #{local_attention_forward.1} parent=67 // pred_check_branch
          %2048 = sbr.rel (%p2046) target = $region72
        $region71: #{local_attention_forward.1} parent=67 // pred_region
          %s2049 = sand.u32 %s165, 1
          %s2050 = scalar_lea.sflag [#allocation4], %s2049
          %s2051 = sand.u32 %s165, 1
          %s2052 = smul.addr %s2051, 256
          %s2053 = scalar_lea.vmem [#allocation10], %s2052
          %2054 = dma.done %s2050, 4096
        $region72: #{local_attention_forward.1} parent=67 // pred_fallthru
          _
      $region68: #{local_attention_forward.1} parent=5 // pred_fallthru
        _
    $region6: #{local_attention_forward.1} parent=1 // loop_footer
      %s24 = sadd.s32 1, %s20
    $region7: #{local_attention_forward.1} parent=1 // loop_footer_branch
      %19 = sbr.rel target = $region3
    $region8: #{local_attention_forward.1} parent=1 // loop_exit
      _
    %2055 = vsyncpa [#allocation3], 1
    %s2056 = scalar_lea.sflag [#allocation3], 1
    %2057 = vsyncpa %s2056, 1
    %2058 = vsyncpa [#allocation6], 1
    %2059 = vsyncpa [#allocation9], 1
    %2060 = vsyncpa [#allocation4], 1
    %s2061 = scalar_lea.sflag [#allocation4], 1
    %2062 = vsyncpa %s2061, 1

</llo_original>
